<compile_context>
chip_gen: v7x
topology: tpu7x:2x2x1
jax: 0.10.0
libtpu: 0.0.40
codegen_flags: <defaults>
</compile_context>

<pallas_src>
import math
import functools

import jax
import jax.numpy as jnp
from jax.experimental import pallas as pl
from jax.experimental.pallas import tpu as pltpu

MXU_DTYPE = jnp.bfloat16                 # MXU operand dtype (f32 accumulation)
VMEM_LIMIT_BYTES = 48 * 1024 * 1024      # headroom below v7x's 64 MiB physical
LN_EPS = 1e-5                            # torch.nn.LayerNorm default


def _layernorm(v, eps=LN_EPS):
    mu = jnp.mean(v, axis=-1, keepdims=True)
    var = jnp.mean(jnp.square(v - mu), axis=-1, keepdims=True)
    return (v - mu) * jax.lax.rsqrt(var + eps)


# --------------- Kernel 1: fused Q/K/V projection (one wide matmul) ---------
def qkv_kernel(x_ref, w_ref, b_ref, q_ref, k_ref, v_ref):
    d = q_ref.shape[-1]
    x = x_ref[...].astype(MXU_DTYPE)                        # (TM, D) bf16
    qkv = jnp.dot(x, w_ref[...], preferred_element_type=jnp.float32)
    qkv = qkv + b_ref[...]                                  # (TM, 3D) f32
    q_ref[...] = qkv[:, 0 * d:1 * d].astype(q_ref.dtype)
    k_ref[...] = qkv[:, 1 * d:2 * d].astype(k_ref.dtype)
    v_ref[...] = qkv[:, 2 * d:3 * d].astype(v_ref.dtype)


# --------------- Kernel 2: attention, all heads of one batch per step -------
def make_attn_kernel(scale):
    def attn_kernel(q_ref, k_ref, v_ref, o_ref):
        # Blocks are (H, S, dh).  Fold 1/sqrt(dh) into q (S*dh elems, not S*S).
        q = q_ref[...] * scale                              # bf16
        k = k_ref[...]
        v = v_ref[...]
        # Contract last dims directly -> no explicit k transpose (saves XLU).
        s = jnp.einsum("hqd,hkd->hqk", q, k,
                       preferred_element_type=jnp.float32)
        s = s - jnp.max(s, axis=-1, keepdims=True)
        p = jnp.exp(s)
        denom = jnp.sum(p, axis=-1, keepdims=True)
        p = p * pl.reciprocal(denom, approx=True)           # EUP slot, ~free
        ctx = jnp.einsum("hqk,hkd->hqd", p.astype(MXU_DTYPE), v,
                         preferred_element_type=jnp.float32)
        o_ref[...] = ctx.astype(o_ref.dtype)
    return attn_kernel


# ------ Kernel 3: out-proj + residual + LN, fused with FFN + residual + LN --
def out_ffn_kernel(ctx_ref, x_ref, wo_ref, bo_ref, g1_ref, be1_ref,
                   w1_ref, b1_ref, w2_ref, b2_ref, g2_ref, be2_ref, o_ref):
    x = x_ref[...]                                          # (TM, D) f32
    # Multi-head attention output projection + residual + LayerNorm
    attn = jnp.dot(ctx_ref[...], wo_ref[...],
                   preferred_element_type=jnp.float32) + bo_ref[...]
    y = _layernorm(attn + x) * g1_ref[...] + be1_ref[...]
    # Position-wise feed-forward + residual + LayerNorm
    h = jnp.dot(y.astype(MXU_DTYPE), w1_ref[...],
                preferred_element_type=jnp.float32) + b1_ref[...]
    h = jnp.maximum(h, 0.0)                                 # ReLU
    z = jnp.dot(h.astype(MXU_DTYPE), w2_ref[...],
                preferred_element_type=jnp.float32) + b2_ref[...]
    o_ref[...] = _layernorm(z + y) * g2_ref[...] + be2_ref[...]


# ----------------------------- Wrapper ---------------------------------------
def prepare_params(params):
    """One-time prep (outside the forward pass): fuse QKV weights/biases and
    cast MXU weight operands to bf16. Biases and LayerNorm params stay f32."""
    return {
        "w_qkv": jnp.concatenate(
            [params["wq"], params["wk"], params["wv"]], axis=1).astype(MXU_DTYPE),
        "b_qkv": jnp.concatenate(
            [params["bq"], params["bk"], params["bv"]], axis=1),
        "wo": params["wo"].astype(MXU_DTYPE), "bo": params["bo"],
        "g1": params["gamma1"], "be1": params["beta1"],
        "w1": params["w1"].astype(MXU_DTYPE), "b1": params["b1"],
        "w2": params["w2"].astype(MXU_DTYPE), "b2": params["b2"],
        "g2": params["gamma2"], "be2": params["beta2"],
    }


@functools.partial(jax.jit, static_argnames=("num_head",))
def encoder_forward(x, prep, num_head):
    B, S, D = x.shape
    H = num_head
    dh = D // H
    BS = B * S
    HID = prep["w1"].shape[1]
    scale = dh ** (-0.5)

    # Row tile: biggest that comfortably fits VMEM (bounded independent of
    # B*S); rows are independent so a cdiv grid with a tail tile is fine.
    TM = min(BS, 512)
    n_row = pl.cdiv(BS, TM)
    row_params = pltpu.CompilerParams(
        dimension_semantics=("parallel",), vmem_limit_bytes=VMEM_LIMIT_BYTES)

    x2d = x.reshape(BS, D)
    row_spec = pl.BlockSpec((TM, D), lambda i: (i, 0))
    const = lambda shape: pl.BlockSpec(shape, lambda i: (0, 0))

    # ---- kernel 1: fused QKV projection, gridded + pipelined over rows
    q2d, k2d, v2d = pl.pallas_call(
        qkv_kernel,
        out_shape=tuple(jax.ShapeDtypeStruct((BS, D), MXU_DTYPE)
                        for _ in range(3)),
        grid=(n_row,),
        in_specs=[row_spec, const((D, 3 * D)), const((1, 3 * D))],
        out_specs=tuple(pl.BlockSpec((TM, D), lambda i: (i, 0))
                        for _ in range(3)),
        compiler_params=row_params,
    )(x2d, prep["w_qkv"], prep["b_qkv"])

    # ---- PyTorch head split: Q.view(B*H, -1, dh) on the (B, S, H*dh) tensor
    qh = q2d.reshape(B * H, S, dh)
    kh = k2d.reshape(B * H, S, dh)
    vh = v2d.reshape(B * H, S, dh)

    # ---- kernel 2: attention, all H heads of one batch per grid step
    head_spec = pl.BlockSpec((H, S, dh), lambda b: (b, 0, 0))
    ctx = pl.pallas_call(
        make_attn_kernel(scale),
        out_shape=jax.ShapeDtypeStruct((B * H, S, dh), MXU_DTYPE),
        grid=(B,),
        in_specs=[head_spec, head_spec, head_spec],
        out_specs=head_spec,
        compiler_params=pltpu.CompilerParams(
            dimension_semantics=("parallel",),
            vmem_limit_bytes=VMEM_LIMIT_BYTES),
    )(qh, kh, vh)

    # ---- context.view(B, -1, H*dh) -> (B*S, D); contiguous -> free reshape
    ctx2d = ctx.reshape(BS, D)

    # ---- kernel 3: out-proj + residual + LN fused with the FFN block
    out2d = pl.pallas_call(
        out_ffn_kernel,
        out_shape=jax.ShapeDtypeStruct((BS, D), jnp.float32),
        grid=(n_row,),
        in_specs=[row_spec, row_spec,
                  const((D, D)), const((1, D)), const((1, D)), const((1, D)),
                  const((D, HID)), const((1, HID)),
                  const((HID, D)), const((1, D)), const((1, D)), const((1, D))],
        out_specs=pl.BlockSpec((TM, D), lambda i: (i, 0)),
        compiler_params=row_params,
    )(ctx2d, x2d,
      prep["wo"], prep["bo"], prep["g1"], prep["be1"],
      prep["w1"], prep["b1"], prep["w2"], prep["b2"],
      prep["g2"], prep["be2"])

    return out2d.reshape(B, S, D)


# ----------------------- Pure-JAX f32 reference (sanity) --------------------
def reference(x, params, num_head):
    B, S, D = x.shape
    H = num_head
    dh = D // H
    x2d = x.reshape(B * S, D)
    q = x2d @ params["wq"] + params["bq"][0]
    k = x2d @ params["wk"] + params["bk"][0]
    v = x2d @ params["wv"] + params["bv"][0]
    qh = q.reshape(B * H, S, dh)
    kh = k.reshape(B * H, S, dh)
    vh = v.reshape(B * H, S, dh)
    a = jnp.einsum("bqd,bkd->bqk", qh, kh) * (dh ** -0.5)
    a = jax.nn.softmax(a, axis=-1)
    ctx = jnp.einsum("bqk,bkd->bqd", a, vh).reshape(B * S, D)
    out = ctx @ params["wo"] + params["bo"][0] + x2d
    y = _layernorm(out) * params["gamma1"][0] + params["beta1"][0]
    h = jax.nn.relu(y @ params["w1"] + params["b1"][0])
    z = h @ params["w2"] + params["b2"][0] + y
    o = _layernorm(z) * params["gamma2"][0] + params["beta2"][0]
    return o.reshape(B, S, D)


def init_params(key, dim_model, hidden):
    # Mimic nn.Linear init: U(-1/sqrt(fan_in), 1/sqrt(fan_in)); weights are
    # stored pre-transposed to (in, out) so the kernels compute x @ W.
    keys = jax.random.split(key, 12)

    def u(k, shape, fan_in):
        b = 1.0 / math.sqrt(fan_in)
        return jax.random.uniform(k, shape, jnp.float32, minval=-b, maxval=b)

    D, Hd = dim_model, hidden
    return {
        "wq": u(keys[0], (D, D), D), "bq": u(keys[1], (1, D), D),
        "wk": u(keys[2], (D, D), D), "bk": u(keys[3], (1, D), D),
        "wv": u(keys[4], (D, D), D), "bv": u(keys[5], (1, D), D),
        "wo": u(keys[6], (D, D), D), "bo": u(keys[7], (1, D), D),
        "gamma1": jnp.ones((1, D), jnp.float32),
        "beta1": jnp.zeros((1, D), jnp.float32),
        "w1": u(keys[8], (D, Hd), D), "b1": u(keys[9], (1, Hd), D),
        "w2": u(keys[10], (Hd, D), Hd), "b2": u(keys[11], (1, D), Hd),
        "gamma2": jnp.ones((1, D), jnp.float32),
        "beta2": jnp.zeros((1, D), jnp.float32),
    }


if __name__ == "__main__":
    # Small but lane-aligned shapes: dim_model multiple of 128 keeps every
    # in-kernel column slice / store lane-dense.
    B, S, D, H, HID = 2, 8, 128, 4, 256
    key = jax.random.PRNGKey(0)
    kx, kp = jax.random.split(key)
    x = jax.random.normal(kx, (B, S, D), dtype=jnp.float32)
    params = init_params(kp, D, HID)
    prep = prepare_params(params)            # one-time weight fusion / bf16 cast

    out = encoder_forward(x, prep, num_head=H)
    out = jax.block_until_ready(out)

    ref = reference(x, params, H)
    assert out.shape == (B, S, D)
    # bf16 MXU operands (per perf review) -> looser tolerance than pure f32.
    assert jnp.allclose(out, ref, atol=5e-2, rtol=5e-2), (
        f"mismatch vs reference, max abs err = {jnp.max(jnp.abs(out - ref))}")

    print("KERNEL_OK")
</pallas_src>

<mosaic_0001>
module attributes {stable_mosaic.version = 11 : i64} {
  func.func @qkv_kernel(%arg0: i32, %arg1: memref<16x128xf32, #tpu.memory_space<vmem>>, %arg2: memref<128x384xbf16, #tpu.memory_space<vmem>>, %arg3: memref<1x384xf32, #tpu.memory_space<vmem>>, %arg4: memref<16x128xbf16, #tpu.memory_space<vmem>>, %arg5: memref<16x128xbf16, #tpu.memory_space<vmem>>, %arg6: memref<16x128xbf16, #tpu.memory_space<vmem>>) attributes {dimension_semantics = [#tpu.dimension_semantics<parallel>], iteration_bounds = array<i64: 1>, scalar_prefetch = 0 : i64, scratch_operands = 0 : i64, tpu.core_type = #tpu.core_type<tc>, window_params = [{transform_indices = @transform_0, window_bounds = array<i64: 16, 128>}, {pipeline_mode = #tpu.pipeline_mode<synchronous>, transform_indices = @transform_1, window_bounds = array<i64: 128, 384>}, {pipeline_mode = #tpu.pipeline_mode<synchronous>, transform_indices = @transform_2, window_bounds = array<i64: 1, 384>}, {transform_indices = @transform_3, window_bounds = array<i64: 16, 128>}, {transform_indices = @transform_4, window_bounds = array<i64: 16, 128>}, {transform_indices = @transform_5, window_bounds = array<i64: 16, 128>}]} {
    %c0 = arith.constant 0 : index
    %c0_0 = arith.constant 0 : index
    %0 = vector.load %arg1[%c0, %c0_0] : memref<16x128xf32, #tpu.memory_space<vmem>>, vector<16x128xf32>
    %1 = arith.truncf %0 : vector<16x128xf32> to vector<16x128xbf16>
    %c0_1 = arith.constant 0 : index
    %c0_2 = arith.constant 0 : index
    %2 = vector.load %arg2[%c0_1, %c0_2] : memref<128x384xbf16, #tpu.memory_space<vmem>>, vector<128x384xbf16>
    %cst = arith.constant dense<0.000000e+00> : vector<16x384xf32>
    %3 = tpu.matmul %1, %2, %cst {dimension_numbers = #tpu.dot_dimension_numbers<[1], [0], [0], [1], [0, 0, 1, 1], [], []>} : vector<16x128xbf16>, vector<128x384xbf16>, vector<16x384xf32> -> vector<16x384xf32>
    %c0_3 = arith.constant 0 : index
    %c0_4 = arith.constant 0 : index
    %4 = vector.load %arg3[%c0_3, %c0_4] : memref<1x384xf32, #tpu.memory_space<vmem>>, vector<1x384xf32>
    %5 = vector.broadcast %4 : vector<1x384xf32> to vector<16x384xf32>
    %6 = arith.addf %3, %5 : vector<16x384xf32>
    %7 = vector.extract_strided_slice %6 {offsets = [0, 0], sizes = [16, 128], strides = [1, 1]} : vector<16x384xf32> to vector<16x128xf32>
    %8 = arith.truncf %7 : vector<16x128xf32> to vector<16x128xbf16>
    %c0_5 = arith.constant 0 : index
    %c0_6 = arith.constant 0 : index
    %9 = vector.load %arg4[%c0_5, %c0_6] : memref<16x128xbf16, #tpu.memory_space<vmem>>, vector<16x128xbf16>
    tpu.vector_store %arg4[%c0_5, %c0_6], %8 {strides = array<i32>} : memref<16x128xbf16, #tpu.memory_space<vmem>>, vector<16x128xbf16>,
    %10 = vector.extract_strided_slice %6 {offsets = [0, 128], sizes = [16, 128], strides = [1, 1]} : vector<16x384xf32> to vector<16x128xf32>
    %11 = arith.truncf %10 : vector<16x128xf32> to vector<16x128xbf16>
    %c0_7 = arith.constant 0 : index
    %c0_8 = arith.constant 0 : index
    %12 = vector.load %arg5[%c0_7, %c0_8] : memref<16x128xbf16, #tpu.memory_space<vmem>>, vector<16x128xbf16>
    tpu.vector_store %arg5[%c0_7, %c0_8], %11 {strides = array<i32>} : memref<16x128xbf16, #tpu.memory_space<vmem>>, vector<16x128xbf16>,
    %13 = vector.extract_strided_slice %6 {offsets = [0, 256], sizes = [16, 128], strides = [1, 1]} : vector<16x384xf32> to vector<16x128xf32>
    %14 = arith.truncf %13 : vector<16x128xf32> to vector<16x128xbf16>
    %c0_9 = arith.constant 0 : index
    %c0_10 = arith.constant 0 : index
    %15 = vector.load %arg6[%c0_9, %c0_10] : memref<16x128xbf16, #tpu.memory_space<vmem>>, vector<16x128xbf16>
    tpu.vector_store %arg6[%c0_9, %c0_10], %14 {strides = array<i32>} : memref<16x128xbf16, #tpu.memory_space<vmem>>, vector<16x128xbf16>,
    return
  }
  func.func @transform_0(%arg0: i32) -> (i32, i32) {
    %c0_i32 = arith.constant 0 : i32
    %c0_i32_0 = arith.constant 0 : i32
    return %arg0, %c0_i32 : i32, i32
  }
  func.func @transform_1(%arg0: i32) -> (i32, i32) {
    %c0_i32 = arith.constant 0 : i32
    %c0_i32_0 = arith.constant 0 : i32
    %c0_i32_1 = arith.constant 0 : i32
    return %c0_i32, %c0_i32_0 : i32, i32
  }
  func.func @transform_2(%arg0: i32) -> (i32, i32) {
    %c0_i32 = arith.constant 0 : i32
    %c0_i32_0 = arith.constant 0 : i32
    %c0_i32_1 = arith.constant 0 : i32
    return %c0_i32, %c0_i32_0 : i32, i32
  }
  func.func @transform_3(%arg0: i32) -> (i32, i32) {
    %c0_i32 = arith.constant 0 : i32
    %c0_i32_0 = arith.constant 0 : i32
    return %arg0, %c0_i32 : i32, i32
  }
  func.func @transform_4(%arg0: i32) -> (i32, i32) {
    %c0_i32 = arith.constant 0 : i32
    %c0_i32_0 = arith.constant 0 : i32
    return %arg0, %c0_i32 : i32, i32
  }
  func.func @transform_5(%arg0: i32) -> (i32, i32) {
    %c0_i32 = arith.constant 0 : i32
    %c0_i32_0 = arith.constant 0 : i32
    return %arg0, %c0_i32 : i32, i32
  }
}

module attributes {stable_mosaic.version = 11 : i64} {
  func.func @attn_kernel(%arg0: i32, %arg1: memref<4x8x32xbf16, #tpu.memory_space<vmem>>, %arg2: memref<4x8x32xbf16, #tpu.memory_space<vmem>>, %arg3: memref<4x8x32xbf16, #tpu.memory_space<vmem>>, %arg4: memref<4x8x32xbf16, #tpu.memory_space<vmem>>) attributes {dimension_semantics = [#tpu.dimension_semantics<parallel>], iteration_bounds = array<i64: 2>, scalar_prefetch = 0 : i64, scratch_operands = 0 : i64, tpu.core_type = #tpu.core_type<tc>, window_params = [{transform_indices = @transform_0, window_bounds = array<i64: 4, 8, 32>}, {transform_indices = @transform_1, window_bounds = array<i64: 4, 8, 32>}, {transform_indices = @transform_2, window_bounds = array<i64: 4, 8, 32>}, {transform_indices = @transform_3, window_bounds = array<i64: 4, 8, 32>}]} {
    %c0 = arith.constant 0 : index
    %c0_0 = arith.constant 0 : index
    %c0_1 = arith.constant 0 : index
    %0 = vector.load %arg1[%c0, %c0_0, %c0_1] : memref<4x8x32xbf16, #tpu.memory_space<vmem>>, vector<4x8x32xbf16>
    %cst = arith.constant 1.767580e-01 : bf16
    %1 = vector.broadcast %cst : bf16 to vector<4x8x32xbf16>
    %2 = arith.mulf %0, %1 : vector<4x8x32xbf16>
    %c0_2 = arith.constant 0 : index
    %c0_3 = arith.constant 0 : index
    %c0_4 = arith.constant 0 : index
    %3 = vector.load %arg2[%c0_2, %c0_3, %c0_4] : memref<4x8x32xbf16, #tpu.memory_space<vmem>>, vector<4x8x32xbf16>
    %c0_5 = arith.constant 0 : index
    %c0_6 = arith.constant 0 : index
    %c0_7 = arith.constant 0 : index
    %4 = vector.load %arg3[%c0_5, %c0_6, %c0_7] : memref<4x8x32xbf16, #tpu.memory_space<vmem>>, vector<4x8x32xbf16>
    "tpu.trace_start"() <{level = 10 : i32, message = "hqd,hkd->hqk"}> : () -> ()
    %cst_8 = arith.constant dense<0.000000e+00> : vector<4x8x8xf32>
    %5 = tpu.matmul %2, %3, %cst_8 {dimension_numbers = #tpu.dot_dimension_numbers<[2], [2], [1], [1], [0, 0, 0, 1, 1, 1], [0], [0]>} : vector<4x8x32xbf16>, vector<4x8x32xbf16>, vector<4x8x8xf32> -> vector<4x8x8xf32>
    "tpu.trace_stop"() : () -> ()
    %cst_9 = arith.constant dense<0xFF800000> : vector<4x8xf32>
    %6 = vector.multi_reduction <maximumf>, %5, %cst_9 [2] : vector<4x8x8xf32> to vector<4x8xf32>
    %7 = vector.shape_cast %6 : vector<4x8xf32> to vector<4x8x1xf32>
    %8 = vector.broadcast %7 : vector<4x8x1xf32> to vector<4x8x8xf32>
    %9 = arith.subf %5, %8 : vector<4x8x8xf32>
    %10 = math.exp %9 : vector<4x8x8xf32>
    %cst_10 = arith.constant dense<0.000000e+00> : vector<4x8xf32>
    %11 = vector.multi_reduction <add>, %10, %cst_10 [2] : vector<4x8x8xf32> to vector<4x8xf32>
    %12 = vector.shape_cast %11 : vector<4x8xf32> to vector<4x8x1xf32>
    %13 = tpu.reciprocal %12 {approx = true} : vector<4x8x1xf32> -> vector<4x8x1xf32>
    %14 = vector.broadcast %13 : vector<4x8x1xf32> to vector<4x8x8xf32>
    %15 = arith.mulf %10, %14 : vector<4x8x8xf32>
    %16 = arith.truncf %15 : vector<4x8x8xf32> to vector<4x8x8xbf16>
    "tpu.trace_start"() <{level = 10 : i32, message = "hqk,hkd->hqd"}> : () -> ()
    %cst_11 = arith.constant dense<0.000000e+00> : vector<4x8x32xf32>
    %17 = tpu.matmul %16, %4, %cst_11 {dimension_numbers = #tpu.dot_dimension_numbers<[2], [1], [1], [2], [0, 0, 0, 1, 1, 2], [0], [0]>} : vector<4x8x8xbf16>, vector<4x8x32xbf16>, vector<4x8x32xf32> -> vector<4x8x32xf32>
    "tpu.trace_stop"() : () -> ()
    %18 = arith.truncf %17 : vector<4x8x32xf32> to vector<4x8x32xbf16>
    %c0_12 = arith.constant 0 : index
    %c0_13 = arith.constant 0 : index
    %c0_14 = arith.constant 0 : index
    %19 = vector.load %arg4[%c0_12, %c0_13, %c0_14] : memref<4x8x32xbf16, #tpu.memory_space<vmem>>, vector<4x8x32xbf16>
    tpu.vector_store %arg4[%c0_12, %c0_13, %c0_14], %18 {strides = array<i32>} : memref<4x8x32xbf16, #tpu.memory_space<vmem>>, vector<4x8x32xbf16>,
    return
  }
  func.func @transform_0(%arg0: i32) -> (i32, i32, i32) {
    %c0_i32 = arith.constant 0 : i32
    %c0_i32_0 = arith.constant 0 : i32
    %c0_i32_1 = arith.constant 0 : i32
    return %arg0, %c0_i32, %c0_i32_0 : i32, i32, i32
  }
  func.func @transform_1(%arg0: i32) -> (i32, i32, i32) {
    %c0_i32 = arith.constant 0 : i32
    %c0_i32_0 = arith.constant 0 : i32
    %c0_i32_1 = arith.constant 0 : i32
    return %arg0, %c0_i32, %c0_i32_0 : i32, i32, i32
  }
  func.func @transform_2(%arg0: i32) -> (i32, i32, i32) {
    %c0_i32 = arith.constant 0 : i32
    %c0_i32_0 = arith.constant 0 : i32
    %c0_i32_1 = arith.constant 0 : i32
    return %arg0, %c0_i32, %c0_i32_0 : i32, i32, i32
  }
  func.func @transform_3(%arg0: i32) -> (i32, i32, i32) {
    %c0_i32 = arith.constant 0 : i32
    %c0_i32_0 = arith.constant 0 : i32
    %c0_i32_1 = arith.constant 0 : i32
    return %arg0, %c0_i32, %c0_i32_0 : i32, i32, i32
  }
}

module attributes {stable_mosaic.version = 11 : i64} {
  func.func @out_ffn_kernel(%arg0: i32, %arg1: memref<16x128xbf16, #tpu.memory_space<vmem>>, %arg2: memref<16x128xf32, #tpu.memory_space<vmem>>, %arg3: memref<128x128xbf16, #tpu.memory_space<vmem>>, %arg4: memref<1x128xf32, #tpu.memory_space<vmem>>, %arg5: memref<1x128xf32, #tpu.memory_space<vmem>>, %arg6: memref<1x128xf32, #tpu.memory_space<vmem>>, %arg7: memref<128x256xbf16, #tpu.memory_space<vmem>>, %arg8: memref<1x256xf32, #tpu.memory_space<vmem>>, %arg9: memref<256x128xbf16, #tpu.memory_space<vmem>>, %arg10: memref<1x128xf32, #tpu.memory_space<vmem>>, %arg11: memref<1x128xf32, #tpu.memory_space<vmem>>, %arg12: memref<1x128xf32, #tpu.memory_space<vmem>>, %arg13: memref<16x128xf32, #tpu.memory_space<vmem>>) attributes {dimension_semantics = [#tpu.dimension_semantics<parallel>], iteration_bounds = array<i64: 1>, scalar_prefetch = 0 : i64, scratch_operands = 0 : i64, tpu.core_type = #tpu.core_type<tc>, window_params = [{transform_indices = @transform_0, window_bounds = array<i64: 16, 128>}, {transform_indices = @transform_1, window_bounds = array<i64: 16, 128>}, {pipeline_mode = #tpu.pipeline_mode<synchronous>, transform_indices = @transform_2, window_bounds = array<i64: 128, 128>}, {pipeline_mode = #tpu.pipeline_mode<synchronous>, transform_indices = @transform_3, window_bounds = array<i64: 1, 128>}, {pipeline_mode = #tpu.pipeline_mode<synchronous>, transform_indices = @transform_4, window_bounds = array<i64: 1, 128>}, {pipeline_mode = #tpu.pipeline_mode<synchronous>, transform_indices = @transform_5, window_bounds = array<i64: 1, 128>}, {pipeline_mode = #tpu.pipeline_mode<synchronous>, transform_indices = @transform_6, window_bounds = array<i64: 128, 256>}, {pipeline_mode = #tpu.pipeline_mode<synchronous>, transform_indices = @transform_7, window_bounds = array<i64: 1, 256>}, {pipeline_mode = #tpu.pipeline_mode<synchronous>, transform_indices = @transform_8, window_bounds = array<i64: 256, 128>}, {pipeline_mode = #tpu.pipeline_mode<synchronous>, transform_indices = @transform_9, window_bounds = array<i64: 1, 128>}, {pipeline_mode = #tpu.pipeline_mode<synchronous>, transform_indices = @transform_10, window_bounds = array<i64: 1, 128>}, {pipeline_mode = #tpu.pipeline_mode<synchronous>, transform_indices = @transform_11, window_bounds = array<i64: 1, 128>}, {transform_indices = @transform_12, window_bounds = array<i64: 16, 128>}]} {
    %c0 = arith.constant 0 : index
    %c0_0 = arith.constant 0 : index
    %0 = vector.load %arg2[%c0, %c0_0] : memref<16x128xf32, #tpu.memory_space<vmem>>, vector<16x128xf32>
    %c0_1 = arith.constant 0 : index
    %c0_2 = arith.constant 0 : index
    %1 = vector.load %arg1[%c0_1, %c0_2] : memref<16x128xbf16, #tpu.memory_space<vmem>>, vector<16x128xbf16>
    %c0_3 = arith.constant 0 : index
    %c0_4 = arith.constant 0 : index
    %2 = vector.load %arg3[%c0_3, %c0_4] : memref<128x128xbf16, #tpu.memory_space<vmem>>, vector<128x128xbf16>
    %cst = arith.constant dense<0.000000e+00> : vector<16x128xf32>
    %3 = tpu.matmul %1, %2, %cst {dimension_numbers = #tpu.dot_dimension_numbers<[1], [0], [0], [1], [0, 0, 1, 1], [], []>} : vector<16x128xbf16>, vector<128x128xbf16>, vector<16x128xf32> -> vector<16x128xf32>
    %c0_5 = arith.constant 0 : index
    %c0_6 = arith.constant 0 : index
    %4 = vector.load %arg4[%c0_5, %c0_6] : memref<1x128xf32, #tpu.memory_space<vmem>>, vector<1x128xf32>
    %5 = vector.broadcast %4 : vector<1x128xf32> to vector<16x128xf32>
    %6 = arith.addf %3, %5 : vector<16x128xf32>
    %7 = arith.addf %6, %0 : vector<16x128xf32>
    %cst_7 = arith.constant dense<0.000000e+00> : vector<16xf32>
    %8 = vector.multi_reduction <add>, %7, %cst_7 [1] : vector<16x128xf32> to vector<16xf32>
    %9 = vector.shape_cast %8 : vector<16xf32> to vector<16x1xf32>
    %cst_8 = arith.constant 1.280000e+02 : f32
    %10 = vector.broadcast %cst_8 : f32 to vector<16x1xf32>
    %11 = arith.divf %9, %10 : vector<16x1xf32>
    %12 = vector.broadcast %11 : vector<16x1xf32> to vector<16x128xf32>
    %13 = arith.subf %7, %12 : vector<16x128xf32>
    %14 = arith.mulf %13, %13 : vector<16x128xf32>
    %cst_9 = arith.constant dense<0.000000e+00> : vector<16xf32>
    %15 = vector.multi_reduction <add>, %14, %cst_9 [1] : vector<16x128xf32> to vector<16xf32>
    %16 = vector.shape_cast %15 : vector<16xf32> to vector<16x1xf32>
    %cst_10 = arith.constant 1.280000e+02 : f32
    %17 = vector.broadcast %cst_10 : f32 to vector<16x1xf32>
    %18 = arith.divf %16, %17 : vector<16x1xf32>
    %19 = vector.broadcast %11 : vector<16x1xf32> to vector<16x128xf32>
    %20 = arith.subf %7, %19 : vector<16x128xf32>
    %cst_11 = arith.constant 9.99999974E-6 : f32
    %21 = vector.broadcast %cst_11 : f32 to vector<16x1xf32>
    %22 = arith.addf %18, %21 : vector<16x1xf32>
    %23 = math.rsqrt %22 : vector<16x1xf32>
    %24 = vector.broadcast %23 : vector<16x1xf32> to vector<16x128xf32>
    %25 = arith.mulf %20, %24 : vector<16x128xf32>
    %c0_12 = arith.constant 0 : index
    %c0_13 = arith.constant 0 : index
    %26 = vector.load %arg5[%c0_12, %c0_13] : memref<1x128xf32, #tpu.memory_space<vmem>>, vector<1x128xf32>
    %27 = vector.broadcast %26 : vector<1x128xf32> to vector<16x128xf32>
    %28 = arith.mulf %25, %27 : vector<16x128xf32>
    %c0_14 = arith.constant 0 : index
    %c0_15 = arith.constant 0 : index
    %29 = vector.load %arg6[%c0_14, %c0_15] : memref<1x128xf32, #tpu.memory_space<vmem>>, vector<1x128xf32>
    %30 = vector.broadcast %29 : vector<1x128xf32> to vector<16x128xf32>
    %31 = arith.addf %28, %30 : vector<16x128xf32>
    %32 = arith.truncf %31 : vector<16x128xf32> to vector<16x128xbf16>
    %c0_16 = arith.constant 0 : index
    %c0_17 = arith.constant 0 : index
    %33 = vector.load %arg7[%c0_16, %c0_17] : memref<128x256xbf16, #tpu.memory_space<vmem>>, vector<128x256xbf16>
    %cst_18 = arith.constant dense<0.000000e+00> : vector<16x256xf32>
    %34 = tpu.matmul %32, %33, %cst_18 {dimension_numbers = #tpu.dot_dimension_numbers<[1], [0], [0], [1], [0, 0, 1, 1], [], []>} : vector<16x128xbf16>, vector<128x256xbf16>, vector<16x256xf32> -> vector<16x256xf32>
    %c0_19 = arith.constant 0 : index
    %c0_20 = arith.constant 0 : index
    %35 = vector.load %arg8[%c0_19, %c0_20] : memref<1x256xf32, #tpu.memory_space<vmem>>, vector<1x256xf32>
    %36 = vector.broadcast %35 : vector<1x256xf32> to vector<16x256xf32>
    %37 = arith.addf %34, %36 : vector<16x256xf32>
    %cst_21 = arith.constant 0.000000e+00 : f32
    %38 = vector.broadcast %cst_21 : f32 to vector<16x256xf32>
    %39 = arith.maximumf %37, %38 : vector<16x256xf32>
    %40 = arith.truncf %39 : vector<16x256xf32> to vector<16x256xbf16>
    %c0_22 = arith.constant 0 : index
    %c0_23 = arith.constant 0 : index
    %41 = vector.load %arg9[%c0_22, %c0_23] : memref<256x128xbf16, #tpu.memory_space<vmem>>, vector<256x128xbf16>
    %cst_24 = arith.constant dense<0.000000e+00> : vector<16x128xf32>
    %42 = tpu.matmul %40, %41, %cst_24 {dimension_numbers = #tpu.dot_dimension_numbers<[1], [0], [0], [1], [0, 0, 1, 1], [], []>} : vector<16x256xbf16>, vector<256x128xbf16>, vector<16x128xf32> -> vector<16x128xf32>
    %c0_25 = arith.constant 0 : index
    %c0_26 = arith.constant 0 : index
    %43 = vector.load %arg10[%c0_25, %c0_26] : memref<1x128xf32, #tpu.memory_space<vmem>>, vector<1x128xf32>
    %44 = vector.broadcast %43 : vector<1x128xf32> to vector<16x128xf32>
    %45 = arith.addf %42, %44 : vector<16x128xf32>
    %46 = arith.addf %45, %31 : vector<16x128xf32>
    %cst_27 = arith.constant dense<0.000000e+00> : vector<16xf32>
    %47 = vector.multi_reduction <add>, %46, %cst_27 [1] : vector<16x128xf32> to vector<16xf32>
    %48 = vector.shape_cast %47 : vector<16xf32> to vector<16x1xf32>
    %cst_28 = arith.constant 1.280000e+02 : f32
    %49 = vector.broadcast %cst_28 : f32 to vector<16x1xf32>
    %50 = arith.divf %48, %49 : vector<16x1xf32>
    %51 = vector.broadcast %50 : vector<16x1xf32> to vector<16x128xf32>
    %52 = arith.subf %46, %51 : vector<16x128xf32>
    %53 = arith.mulf %52, %52 : vector<16x128xf32>
    %cst_29 = arith.constant dense<0.000000e+00> : vector<16xf32>
    %54 = vector.multi_reduction <add>, %53, %cst_29 [1] : vector<16x128xf32> to vector<16xf32>
    %55 = vector.shape_cast %54 : vector<16xf32> to vector<16x1xf32>
    %cst_30 = arith.constant 1.280000e+02 : f32
    %56 = vector.broadcast %cst_30 : f32 to vector<16x1xf32>
    %57 = arith.divf %55, %56 : vector<16x1xf32>
    %58 = vector.broadcast %50 : vector<16x1xf32> to vector<16x128xf32>
    %59 = arith.subf %46, %58 : vector<16x128xf32>
    %cst_31 = arith.constant 9.99999974E-6 : f32
    %60 = vector.broadcast %cst_31 : f32 to vector<16x1xf32>
    %61 = arith.addf %57, %60 : vector<16x1xf32>
    %62 = math.rsqrt %61 : vector<16x1xf32>
    %63 = vector.broadcast %62 : vector<16x1xf32> to vector<16x128xf32>
    %64 = arith.mulf %59, %63 : vector<16x128xf32>
    %c0_32 = arith.constant 0 : index
    %c0_33 = arith.constant 0 : index
    %65 = vector.load %arg11[%c0_32, %c0_33] : memref<1x128xf32, #tpu.memory_space<vmem>>, vector<1x128xf32>
    %66 = vector.broadcast %65 : vector<1x128xf32> to vector<16x128xf32>
    %67 = arith.mulf %64, %66 : vector<16x128xf32>
    %c0_34 = arith.constant 0 : index
    %c0_35 = arith.constant 0 : index
    %68 = vector.load %arg12[%c0_34, %c0_35] : memref<1x128xf32, #tpu.memory_space<vmem>>, vector<1x128xf32>
    %69 = vector.broadcast %68 : vector<1x128xf32> to vector<16x128xf32>
    %70 = arith.addf %67, %69 : vector<16x128xf32>
    %c0_36 = arith.constant 0 : index
    %c0_37 = arith.constant 0 : index
    %71 = vector.load %arg13[%c0_36, %c0_37] : memref<16x128xf32, #tpu.memory_space<vmem>>, vector<16x128xf32>
    tpu.vector_store %arg13[%c0_36, %c0_37], %70 {strides = array<i32>} : memref<16x128xf32, #tpu.memory_space<vmem>>, vector<16x128xf32>,
    return
  }
  func.func @transform_0(%arg0: i32) -> (i32, i32) {
    %c0_i32 = arith.constant 0 : i32
    %c0_i32_0 = arith.constant 0 : i32
    return %arg0, %c0_i32 : i32, i32
  }
  func.func @transform_1(%arg0: i32) -> (i32, i32) {
    %c0_i32 = arith.constant 0 : i32
    %c0_i32_0 = arith.constant 0 : i32
    return %arg0, %c0_i32 : i32, i32
  }
  func.func @transform_2(%arg0: i32) -> (i32, i32) {
    %c0_i32 = arith.constant 0 : i32
    %c0_i32_0 = arith.constant 0 : i32
    %c0_i32_1 = arith.constant 0 : i32
    return %c0_i32, %c0_i32_0 : i32, i32
  }
  func.func @transform_3(%arg0: i32) -> (i32, i32) {
    %c0_i32 = arith.constant 0 : i32
    %c0_i32_0 = arith.constant 0 : i32
    %c0_i32_1 = arith.constant 0 : i32
    return %c0_i32, %c0_i32_0 : i32, i32
  }
  func.func @transform_4(%arg0: i32) -> (i32, i32) {
    %c0_i32 = arith.constant 0 : i32
    %c0_i32_0 = arith.constant 0 : i32
    %c0_i32_1 = arith.constant 0 : i32
    return %c0_i32, %c0_i32_0 : i32, i32
  }
  func.func @transform_5(%arg0: i32) -> (i32, i32) {
    %c0_i32 = arith.constant 0 : i32
    %c0_i32_0 = arith.constant 0 : i32
    %c0_i32_1 = arith.constant 0 : i32
    return %c0_i32, %c0_i32_0 : i32, i32
  }
  func.func @transform_6(%arg0: i32) -> (i32, i32) {
    %c0_i32 = arith.constant 0 : i32
    %c0_i32_0 = arith.constant 0 : i32
    %c0_i32_1 = arith.constant 0 : i32
    return %c0_i32, %c0_i32_0 : i32, i32
  }
  func.func @transform_7(%arg0: i32) -> (i32, i32) {
    %c0_i32 = arith.constant 0 : i32
    %c0_i32_0 = arith.constant 0 : i32
    %c0_i32_1 = arith.constant 0 : i32
    return %c0_i32, %c0_i32_0 : i32, i32
  }
  func.func @transform_8(%arg0: i32) -> (i32, i32) {
    %c0_i32 = arith.constant 0 : i32
    %c0_i32_0 = arith.constant 0 : i32
    %c0_i32_1 = arith.constant 0 : i32
    return %c0_i32, %c0_i32_0 : i32, i32
  }
  func.func @transform_9(%arg0: i32) -> (i32, i32) {
    %c0_i32 = arith.constant 0 : i32
    %c0_i32_0 = arith.constant 0 : i32
    %c0_i32_1 = arith.constant 0 : i32
    return %c0_i32, %c0_i32_0 : i32, i32
  }
  func.func @transform_10(%arg0: i32) -> (i32, i32) {
    %c0_i32 = arith.constant 0 : i32
    %c0_i32_0 = arith.constant 0 : i32
    %c0_i32_1 = arith.constant 0 : i32
    return %c0_i32, %c0_i32_0 : i32, i32
  }
  func.func @transform_11(%arg0: i32) -> (i32, i32) {
    %c0_i32 = arith.constant 0 : i32
    %c0_i32_0 = arith.constant 0 : i32
    %c0_i32_1 = arith.constant 0 : i32
    return %c0_i32, %c0_i32_0 : i32, i32
  }
  func.func @transform_12(%arg0: i32) -> (i32, i32) {
    %c0_i32 = arith.constant 0 : i32
    %c0_i32_0 = arith.constant 0 : i32
    return %arg0, %c0_i32 : i32, i32
  }
}

</mosaic_0001>

<llo_original>
// kernel: encoder_forward.3
$region0: #{encoder_forward.3}
  #allocation0 [shape = 'u32[]', space=smem, size = 0x4, offset = 0x4, fixed_abs, tag = 'smem constant byte address 0x4 - core index']
  #allocation1 [shape = 'u32[144,128]{1,0:T(1,128)}', space=vmem, size = 0x12000, scoped, tag = 'internal scratch']
  %s0 = inlined_call_operand.hbm [shape: f32[16,128], index: 0, kind: input, shape index: {}]
  %s1 = inlined_call_operand.hbm [shape: bf16[128,384], index: 1, kind: input, shape index: {}]
  %s2 = inlined_call_operand.vmem [shape: f32[1,384], index: 2, kind: input, shape index: {}]
  %s3 = inlined_call_operand.vmem [shape: bf16[16,128], index: 3, kind: output, shape index: {0}]
  %s4 = inlined_call_operand.vmem [shape: bf16[16,128], index: 4, kind: output, shape index: {1}]
  %s5 = inlined_call_operand.vmem [shape: bf16[16,128], index: 5, kind: output, shape index: {2}]
  %6 = xla_tuple %s3, %s4, %s5
  %s7 = sld [smem:[#allocation0]]
  $region46: #{encoder_forward.3} parent=0
    _
  %s9 = ssub.s32 1, %s7
  %s10 = scalar_select 0, %s9, %s7
  $region1: #{encoder_forward.3} parent=0
    #allocation2 [shape = 'u8[8192]{0}', space=vmem, size = 0x2000, scoped, tag = 'input window, operand 0, single buffered']
    #allocation3 [shape = 's32[1]{0}', space=sflag, size = 0x4, scoped, tag = 'scoped memory for encoder_forward.3']
    #allocation4 [shape = 'u8[98304]{0}', space=vmem, size = 0x18000, scoped, tag = 'input window, operand 1, single buffered']
    #allocation5 [shape = 's32[1]{0}', space=sflag, size = 0x4, scoped, tag = 'scoped memory for encoder_forward.3']
    %11 = vsyncpa [#allocation3], 0
    %12 = vsyncpa [#allocation5], 0
    // Predicated region
    $region2: #{encoder_forward.3} parent=1 // pred_check
      _
    $region3: #{encoder_forward.3} parent=1 // pred_check_branch
      %14 = sbr.rel (0) target = $region5
    $region4: #{encoder_forward.3} parent=1 // pred_region
      %s16 = ssub.s32 256, 256
      %17 = vsyncadd [#allocation3], %s16
      %s18 = sshll.u32 [#allocation2], 4
      %s19 = int_to_ptr.vmem [resolvable:$true] %s18
      %24 = dma.hbm_to_vmem [thread:$0]  %s0, 256, %s19, [#allocation3], 128, 128, 8
    $region5: #{encoder_forward.3} parent=1 // pred_fallthru
      _
    // Predicated region
    $region6: #{encoder_forward.3} parent=1 // pred_check
      _
    $region7: #{encoder_forward.3} parent=1 // pred_check_branch
      %26 = sbr.rel (0) target = $region9
    $region8: #{encoder_forward.3} parent=1 // pred_region
      %s28 = ssub.s32 3072, 3072
      %29 = vsyncadd [#allocation5], %s28
      %s30 = sshll.u32 [#allocation4], 4
      %s31 = int_to_ptr.vmem [resolvable:$true] %s30
      %36 = dma.hbm_to_vmem [thread:$0]  %s1, 3072, %s31, [#allocation5], 192, 192, 12
    $region9: #{encoder_forward.3} parent=1 // pred_fallthru
      _
    // Predicated region
    $region10: #{encoder_forward.3} parent=1 // pred_check
      _
    $region11: #{encoder_forward.3} parent=1 // pred_check_branch
      %38 = sbr.rel (0) target = $region13
    $region12: #{encoder_forward.3} parent=1 // pred_region
      _
    $region13: #{encoder_forward.3} parent=1 // pred_fallthru
      _
    // Predicated region
    $region14: #{encoder_forward.3} parent=1 // pred_check
      _
    $region15: #{encoder_forward.3} parent=1 // pred_check_branch
      %40 = sbr.rel (0) target = $region17
    $region16: #{encoder_forward.3} parent=1 // pred_region
      %41 = dma.done [#allocation3], 256
    $region17: #{encoder_forward.3} parent=1 // pred_fallthru
      _
    // Predicated region
    $region18: #{encoder_forward.3} parent=1 // pred_check
      _
    $region19: #{encoder_forward.3} parent=1 // pred_check_branch
      %43 = sbr.rel (0) target = $region21
    $region20: #{encoder_forward.3} parent=1 // pred_region
      %44 = dma.done [#allocation5], 3072
    $region21: #{encoder_forward.3} parent=1 // pred_fallthru
      _
    %v46 = vld [vmem:[#allocation2] sm:$0xff]
    %v47 = vld [vmem:[#allocation2 + $0x8] sm:$0xff]
    %v48 = vpack.c.bf16 %v47, %v46
    %v49 = vld [vmem:[#allocation4] sm:$0xff]
    %v50 = vld [vmem:[#allocation4 + $0x8] sm:$0xf]
    %v51 = vld [vmem:[#allocation4 + $0xc] sm:$0xff]
    %v52 = vld [vmem:[#allocation4 + $0x14] sm:$0xf]
    %v53 = vld [vmem:[#allocation4 + $0x18] sm:$0xff]
    %v54 = vld [vmem:[#allocation4 + $0x20] sm:$0xf]
    %v55 = vld [vmem:[#allocation4 + $0x24] sm:$0xff]
    %v56 = vld [vmem:[#allocation4 + $0x2c] sm:$0xf]
    %v57 = vld [vmem:[#allocation4 + $0x30] sm:$0xff]
    %v58 = vld [vmem:[#allocation4 + $0x38] sm:$0xf]
    %v59 = vld [vmem:[#allocation4 + $0x3c] sm:$0xff]
    %v60 = vld [vmem:[#allocation4 + $0x44] sm:$0xf]
    %v61 = vld [vmem:[#allocation4 + $0x48] sm:$0xff]
    %v62 = vld [vmem:[#allocation4 + $0x50] sm:$0xf]
    %v63 = vld [vmem:[#allocation4 + $0x54] sm:$0xff]
    %v64 = vld [vmem:[#allocation4 + $0x5c] sm:$0xf]
    %v65 = vld [vmem:[#allocation4 + $0x60] sm:$0xff]
    %v66 = vld [vmem:[#allocation4 + $0x68] sm:$0xf]
    %v67 = vld [vmem:[#allocation4 + $0x6c] sm:$0xff]
    %v68 = vld [vmem:[#allocation4 + $0x74] sm:$0xf]
    %v69 = vld [vmem:[#allocation4 + $0x78] sm:$0xff]
    %v70 = vld [vmem:[#allocation4 + $0x80] sm:$0xf]
    %v71 = vld [vmem:[#allocation4 + $0x84] sm:$0xff]
    %v72 = vld [vmem:[#allocation4 + $0x8c] sm:$0xf]
    %v73 = vld [vmem:[#allocation4 + $0x90] sm:$0xff]
    %v74 = vld [vmem:[#allocation4 + $0x98] sm:$0xf]
    %v75 = vld [vmem:[#allocation4 + $0x9c] sm:$0xff]
    %v76 = vld [vmem:[#allocation4 + $0xa4] sm:$0xf]
    %v77 = vld [vmem:[#allocation4 + $0xa8] sm:$0xff]
    %v78 = vld [vmem:[#allocation4 + $0xb0] sm:$0xf]
    %v79 = vld [vmem:[#allocation4 + $0xb4] sm:$0xff]
    %v80 = vld [vmem:[#allocation4 + $0xbc] sm:$0xf]
    %v81 = vld [vmem:[%s2] sm:$0x7]
    %v83 = vlaneseq
    %v84 = vshrl.u32 %v83, 7
    %v85 = vsub.s32 0, %v84
    %v86 = vrot.slane %v81, %v85
    %v87 = vlaneseq
    %v88 = vshrl.u32 %v87, 7
    %v89 = vsub.s32 1, %v88
    %v90 = vrot.slane %v81, %v89
    %v91 = vlaneseq
    %v92 = vshrl.u32 %v91, 7
    %v93 = vsub.s32 2, %v92
    %v94 = vrot.slane %v81, %v93
    %v130 = vunpack.c.l.b16 %v49
    %v131 = vunpack.c.h.b16 %v49
    %v132 = vunpack.c.l.b16 %v50
    %v133 = vunpack.c.l.b16 %v51
    %v134 = vunpack.c.h.b16 %v51
    %v135 = vunpack.c.l.b16 %v52
    %v136 = vunpack.c.l.b16 %v53
    %v137 = vunpack.c.h.b16 %v53
    %v138 = vunpack.c.l.b16 %v54
    %v139 = vunpack.c.l.b16 %v55
    %v140 = vunpack.c.h.b16 %v55
    %v141 = vunpack.c.l.b16 %v56
    %v142 = vunpack.c.l.b16 %v57
    %v143 = vunpack.c.h.b16 %v57
    %v144 = vunpack.c.l.b16 %v58
    %v145 = vunpack.c.l.b16 %v59
    %v146 = vunpack.c.h.b16 %v59
    %v147 = vunpack.c.l.b16 %v60
    %v148 = vunpack.c.l.b16 %v61
    %v149 = vunpack.c.h.b16 %v61
    %v150 = vunpack.c.l.b16 %v62
    %v151 = vunpack.c.l.b16 %v63
    %v152 = vunpack.c.h.b16 %v63
    %v153 = vunpack.c.l.b16 %v64
    %v154 = vunpack.c.l.b16 %v65
    %v155 = vunpack.c.h.b16 %v65
    %v156 = vunpack.c.l.b16 %v66
    %v157 = vunpack.c.l.b16 %v67
    %v158 = vunpack.c.h.b16 %v67
    %v159 = vunpack.c.l.b16 %v68
    %v160 = vunpack.c.l.b16 %v69
    %v161 = vunpack.c.h.b16 %v69
    %v162 = vunpack.c.l.b16 %v70
    %v163 = vunpack.c.l.b16 %v71
    %v164 = vunpack.c.h.b16 %v71
    %v165 = vunpack.c.l.b16 %v72
    %v166 = vunpack.c.l.b16 %v73
    %v167 = vunpack.c.h.b16 %v73
    %v168 = vunpack.c.l.b16 %v74
    %v169 = vunpack.c.l.b16 %v75
    %v170 = vunpack.c.h.b16 %v75
    %v171 = vunpack.c.l.b16 %v76
    %v172 = vunpack.c.l.b16 %v77
    %v173 = vunpack.c.h.b16 %v77
    %v174 = vunpack.c.l.b16 %v78
    %v175 = vunpack.c.l.b16 %v79
    %v176 = vunpack.c.h.b16 %v79
    %v177 = vunpack.c.l.b16 %v80
    %v178 = vpack.c.b16 %v133, %v130
    %v179 = vpack.c.b16 %v134, %v131
    %v180 = vpack.c.b16 %v135, %v132
    %v181 = vpack.c.b16 %v139, %v136
    %v182 = vpack.c.b16 %v140, %v137
    %v183 = vpack.c.b16 %v141, %v138
    %v184 = vpack.c.b16 %v145, %v142
    %v185 = vpack.c.b16 %v146, %v143
    %v186 = vpack.c.b16 %v147, %v144
    %v187 = vpack.c.b16 %v151, %v148
    %v188 = vpack.c.b16 %v152, %v149
    %v189 = vpack.c.b16 %v153, %v150
    %v190 = vpack.c.b16 %v157, %v154
    %v191 = vpack.c.b16 %v158, %v155
    %v192 = vpack.c.b16 %v159, %v156
    %v193 = vpack.c.b16 %v163, %v160
    %v194 = vpack.c.b16 %v164, %v161
    %v195 = vpack.c.b16 %v165, %v162
    %v196 = vpack.c.b16 %v169, %v166
    %v197 = vpack.c.b16 %v170, %v167
    %v198 = vpack.c.b16 %v171, %v168
    %v199 = vpack.c.b16 %v175, %v172
    %v200 = vpack.c.b16 %v176, %v173
    %v201 = vpack.c.b16 %v177, %v174
    %226 = vmatprep.subr.bf16.mxu0 %v179
    %227 = vmatpush1.bf16.msra.mxu0 %v178
    %228 = vmatprep.subr.bf16.mxu0 %v182
    %229 = vmatpush1.bf16.msra.mxu0 %v181
    %230 = vmatprep.subr.bf16.mxu0 %v185
    %231 = vmatpush1.bf16.msra.mxu0 %v184
    %232 = vmatprep.subr.bf16.mxu0 %v188
    %233 = vmatpush1.bf16.msra.mxu0 %v187
    %234 = vmatprep.subr.bf16.mxu0 %v191
    %235 = vmatpush1.bf16.msra.mxu0 %v190
    %236 = vmatprep.subr.bf16.mxu0 %v194
    %237 = vmatpush1.bf16.msra.mxu0 %v193
    %238 = vmatprep.subr.bf16.mxu0 %v197
    %239 = vmatpush1.bf16.msra.mxu0 %v196
    %240 = vmatprep.subr.bf16.mxu0 %v200
    %241 = vmatpush1.bf16.msra.mxu0 %v199
    %242 = vmatprep.subr.bf16.mxu0 0
    %243 = vmatpush1.bf16.msra.mxu0 0
    %244 = vmatprep.subr.bf16.mxu0 0
    %245 = vmatpush1.bf16.msra.mxu0 0
    %246 = vmatprep.subr.bf16.mxu0 0
    %247 = vmatpush1.bf16.msra.mxu0 0
    %248 = vmatprep.subr.bf16.mxu0 0
    %249 = vmatpush1.bf16.msra.mxu0 0
    %250 = vmatprep.subr.bf16.mxu0 0
    %251 = vmatpush1.bf16.msra.mxu0 0
    %252 = vmatprep.subr.bf16.mxu0 0
    %253 = vmatpush1.bf16.msra.mxu0 0
    %254 = vmatprep.subr.bf16.mxu0 0
    %255 = vmatpush1.bf16.msra.mxu0 0
    %256 = vmatprep.subr.bf16.mxu0 0
    %257 = vmatpush1.bf16.msra.mxu0 0
    %258 = vmatprep.mubr.bf16.mxu0 0
    %259 = vmatmul.mubr.bf16.gmra.mrb[0].mxu0 %v48
    %v260 = vpop.f32.mrb[0].mxu0
    %v261 = vadd.f32 %v86, %v260
    %v262 = vpop.f32.mrb[0].mxu0
    %v263 = vadd.f32 %v90, %v262
    %v264 = vpop.f32.mrb[0].mxu0
    %v265 = vadd.f32 %v86, %v264
    %v266 = vpop.f32.mrb[0].mxu0
    %v267 = vadd.f32 %v90, %v266
    %268 = vdwg.mxu0
    %269 = vmatprep.subr.bf16.mxu0 0
    %270 = vmatpush1.bf16.msra.mxu0 %v180
    %271 = vmatprep.subr.bf16.mxu0 0
    %272 = vmatpush1.bf16.msra.mxu0 %v183
    %273 = vmatprep.subr.bf16.mxu0 0
    %274 = vmatpush1.bf16.msra.mxu0 %v186
    %275 = vmatprep.subr.bf16.mxu0 0
    %276 = vmatpush1.bf16.msra.mxu0 %v189
    %277 = vmatprep.subr.bf16.mxu0 0
    %278 = vmatpush1.bf16.msra.mxu0 %v192
    %279 = vmatprep.subr.bf16.mxu0 0
    %280 = vmatpush1.bf16.msra.mxu0 %v195
    %281 = vmatprep.subr.bf16.mxu0 0
    %282 = vmatpush1.bf16.msra.mxu0 %v198
    %283 = vmatprep.subr.bf16.mxu0 0
    %284 = vmatpush1.bf16.msra.mxu0 %v201
    %285 = vmatprep.subr.bf16.mxu0 0
    %286 = vmatpush1.bf16.msra.mxu0 0
    %287 = vmatprep.subr.bf16.mxu0 0
    %288 = vmatpush1.bf16.msra.mxu0 0
    %289 = vmatprep.subr.bf16.mxu0 0
    %290 = vmatpush1.bf16.msra.mxu0 0
    %291 = vmatprep.subr.bf16.mxu0 0
    %292 = vmatpush1.bf16.msra.mxu0 0
    %293 = vmatprep.subr.bf16.mxu0 0
    %294 = vmatpush1.bf16.msra.mxu0 0
    %295 = vmatprep.subr.bf16.mxu0 0
    %296 = vmatpush1.bf16.msra.mxu0 0
    %297 = vmatprep.subr.bf16.mxu0 0
    %298 = vmatpush1.bf16.msra.mxu0 0
    %299 = vmatprep.subr.bf16.mxu0 0
    %300 = vmatpush1.bf16.msra.mxu0 0
    %301 = vmatprep.mubr.bf16.mxu0 0
    %302 = vmatmul.mubr.bf16.gmra.mrb[0].mxu0 %v48
    %v303 = vpop.f32.mrb[0].mxu0
    %v304 = vadd.f32 %v94, %v303
    %v305 = vpop.f32.mrb[0].mxu0
    %v306 = vpop.f32.mrb[0].mxu0
    %v307 = vadd.f32 %v94, %v306
    %v308 = vpop.f32.mrb[0].mxu0
    %309 = vdwg.mxu0
    %v310 = vpack.c.bf16 %v265, %v261
    %v312 = vunpack.c.l.b16 %v310
    %v313 = vunpack.c.h.b16 %v310
    %v314 = vpack.c.b16 %v312, %v312
    %v315 = vpack.c.b16 %v313, %v313
    %318 = vst [vmem:[%s3] sm:$0xf] %v314
    %319 = vst [vmem:[%s3 + $0x4] sm:$0xf] %v315
    %v320 = vpack.c.bf16 %v267, %v263
    %v322 = vunpack.c.l.b16 %v320
    %v323 = vunpack.c.h.b16 %v320
    %v324 = vpack.c.b16 %v322, %v322
    %v325 = vpack.c.b16 %v323, %v323
    %328 = vst [vmem:[%s4] sm:$0xf] %v324
    %329 = vst [vmem:[%s4 + $0x4] sm:$0xf] %v325
    %v330 = vpack.c.bf16 %v307, %v304
    %v332 = vunpack.c.l.b16 %v330
    %v333 = vunpack.c.h.b16 %v330
    %v334 = vpack.c.b16 %v332, %v332
    %v335 = vpack.c.b16 %v333, %v333
    %338 = vst [vmem:[%s5] sm:$0xf] %v334
    %339 = vst [vmem:[%s5 + $0x4] sm:$0xf] %v335
    // Predicated region
    $region22: #{encoder_forward.3} parent=1 // pred_check
      _
    $region23: #{encoder_forward.3} parent=1 // pred_check_branch
      %341 = sbr.rel (0) target = $region25
    $region24: #{encoder_forward.3} parent=1 // pred_region
      _
    $region25: #{encoder_forward.3} parent=1 // pred_fallthru
      _
    // Predicated region
    $region26: #{encoder_forward.3} parent=1 // pred_check
      _
    $region27: #{encoder_forward.3} parent=1 // pred_check_branch
      %343 = sbr.rel (0) target = $region29
    $region28: #{encoder_forward.3} parent=1 // pred_region
      _
    $region29: #{encoder_forward.3} parent=1 // pred_fallthru
      _
    // Predicated region
    $region30: #{encoder_forward.3} parent=1 // pred_check
      _
    $region31: #{encoder_forward.3} parent=1 // pred_check_branch
      %345 = sbr.rel (0) target = $region33
    $region32: #{encoder_forward.3} parent=1 // pred_region
      _
    $region33: #{encoder_forward.3} parent=1 // pred_fallthru
      _
    // Predicated region
    $region34: #{encoder_forward.3} parent=1 // pred_check
      _
    $region35: #{encoder_forward.3} parent=1 // pred_check_branch
      %347 = sbr.rel (0) target = $region37
    $region36: #{encoder_forward.3} parent=1 // pred_region
      _
    $region37: #{encoder_forward.3} parent=1 // pred_fallthru
      _
    // Predicated region
    $region38: #{encoder_forward.3} parent=1 // pred_check
      _
    $region39: #{encoder_forward.3} parent=1 // pred_check_branch
      %349 = sbr.rel (0) target = $region41
    $region40: #{encoder_forward.3} parent=1 // pred_region
      _
    $region41: #{encoder_forward.3} parent=1 // pred_fallthru
      _
    // Predicated region
    $region42: #{encoder_forward.3} parent=1 // pred_check
      _
    $region43: #{encoder_forward.3} parent=1 // pred_check_branch
      %351 = sbr.rel (0) target = $region45
    $region44: #{encoder_forward.3} parent=1 // pred_region
      _
    $region45: #{encoder_forward.3} parent=1 // pred_fallthru
      _
    %352 = vsyncpa [#allocation3], 1
    %353 = vsyncpa [#allocation5], 1

// kernel: encoder_forward.4
$region0: #{encoder_forward.4}
  #allocation0 [shape = 'u32[]', space=smem, size = 0x4, offset = 0x4, fixed_abs, tag = 'smem constant byte address 0x4 - core index']
  #allocation1 [shape = 'u32[144,128]{1,0:T(1,128)}', space=vmem, size = 0x12000, scoped, tag = 'internal scratch']
  %s0 = inlined_call_operand.vmem [shape: bf16[8,8,32], index: 0, kind: input, shape index: {}]
  %s1 = inlined_call_operand.vmem [shape: bf16[8,8,32], index: 1, kind: input, shape index: {}]
  %s2 = inlined_call_operand.vmem [shape: bf16[8,8,32], index: 2, kind: input, shape index: {}]
  %s3 = inlined_call_operand.vmem [shape: bf16[8,8,32], index: 3, kind: output, shape index: {}]
  %s4 = sld [smem:[#allocation0]]
  $region45: #{encoder_forward.4} parent=0
    _
  %s6 = ssub.s32 1, %s4
  %s7 = scalar_select 0, %s6, %s4
  loop: start=0, step=1, limit=4
  $region2: #{encoder_forward.4} parent=0 // loop_pre_header
    _
  $region3: #{encoder_forward.4} parent=0 // loop_header
    %s9 = sphi 0, %s13
    %p10 = scmp.ge.s32.totalorder %s9, 4
    %s19 = sphi 0, %s21
    %s22 = sphi 0, %s19
    %s23 = sphi 0, %s22
    %s39 = sphi 0, %s23
    %s45 = sphi 0, %s47
    %s48 = sphi 0, %s45
    %s49 = sphi 0, %s48
    %s65 = sphi 0, %s49
    %s71 = sphi 0, %s73
    %s74 = sphi 0, %s71
    %s75 = sphi 0, %s74
    %s91 = sphi 0, %s75
    %s97 = sphi 0, %s99
    %s100 = sphi 0, %s97
    %s101 = sphi 0, %s100
    %s117 = sphi 0, %s101
  $region4: #{encoder_forward.4} parent=0 // loop_header_branch
    %12 = sbr.rel (%p10) target = $region8
  $region5: #{encoder_forward.4} parent=0 // loop_body
    %s14 = ssub.s32 %s9, 1
    %s15 = ssub.s32 %s9, 2
    %s16 = sadd.s32 %s9, 1
    %s17 = ssub.s32 %s9, %s16
    %p18 = scmp.eq.s32.totalorder %s17, 0
    %s20 = sadd.s32 %s19, 1
    %s21 = scalar_select %p18, %s19, %s20
    %p24 = pneg %p18
    %p25 = scmp.eq.s32.totalorder %s9, 1
    %p26 = por %p24, %p25
    %p27 = scmp.ne.s32.totalorder %s19, %s22
    %p28 = scmp.eq.s32.totalorder %s9, 0
    %p29 = por %p27, %p28
    %p30 = scmp.ne.s32.totalorder %s19, %s22
    %p31 = scmp.eq.s32.totalorder %s14, 1
    %p32 = por %p30, %p31
    %p33 = scmp.ne.s32.totalorder %s22, %s23
    %p34 = scmp.eq.s32.totalorder %s14, 0
    %p35 = por %p33, %p34
    %p36 = scmp.ne.s32.totalorder %s22, %s23
    %p37 = scmp.eq.s32.totalorder %s15, 1
    %p38 = por %p36, %p37
    %p40 = scmp.ne.s32.totalorder %s23, %s39
    %p41 = scmp.eq.s32.totalorder %s15, 0
    %p42 = por %p40, %p41
    %s43 = ssub.s32 %s9, %s16
    %p44 = scmp.eq.s32.totalorder %s43, 0
    %s46 = sadd.s32 %s45, 1
    %s47 = scalar_select %p44, %s45, %s46
    %p50 = pneg %p44
    %p51 = scmp.eq.s32.totalorder %s9, 1
    %p52 = por %p50, %p51
    %p53 = scmp.ne.s32.totalorder %s45, %s48
    %p54 = scmp.eq.s32.totalorder %s9, 0
    %p55 = por %p53, %p54
    %p56 = scmp.ne.s32.totalorder %s45, %s48
    %p57 = scmp.eq.s32.totalorder %s14, 1
    %p58 = por %p56, %p57
    %p59 = scmp.ne.s32.totalorder %s48, %s49
    %p60 = scmp.eq.s32.totalorder %s14, 0
    %p61 = por %p59, %p60
    %p62 = scmp.ne.s32.totalorder %s48, %s49
    %p63 = scmp.eq.s32.totalorder %s15, 1
    %p64 = por %p62, %p63
    %p66 = scmp.ne.s32.totalorder %s49, %s65
    %p67 = scmp.eq.s32.totalorder %s15, 0
    %p68 = por %p66, %p67
    %s69 = ssub.s32 %s9, %s16
    %p70 = scmp.eq.s32.totalorder %s69, 0
    %s72 = sadd.s32 %s71, 1
    %s73 = scalar_select %p70, %s71, %s72
    %p76 = pneg %p70
    %p77 = scmp.eq.s32.totalorder %s9, 1
    %p78 = por %p76, %p77
    %p79 = scmp.ne.s32.totalorder %s71, %s74
    %p80 = scmp.eq.s32.totalorder %s9, 0
    %p81 = por %p79, %p80
    %p82 = scmp.ne.s32.totalorder %s71, %s74
    %p83 = scmp.eq.s32.totalorder %s14, 1
    %p84 = por %p82, %p83
    %p85 = scmp.ne.s32.totalorder %s74, %s75
    %p86 = scmp.eq.s32.totalorder %s14, 0
    %p87 = por %p85, %p86
    %p88 = scmp.ne.s32.totalorder %s74, %s75
    %p89 = scmp.eq.s32.totalorder %s15, 1
    %p90 = por %p88, %p89
    %p92 = scmp.ne.s32.totalorder %s75, %s91
    %p93 = scmp.eq.s32.totalorder %s15, 0
    %p94 = por %p92, %p93
    %s95 = ssub.s32 %s9, %s16
    %p96 = scmp.eq.s32.totalorder %s95, 0
    %s98 = sadd.s32 %s97, 1
    %s99 = scalar_select %p96, %s97, %s98
    %p102 = pneg %p96
    %p103 = scmp.eq.s32.totalorder %s9, 1
    %p104 = por %p102, %p103
    %p105 = scmp.ne.s32.totalorder %s97, %s100
    %p106 = scmp.eq.s32.totalorder %s9, 0
    %p107 = por %p105, %p106
    %p108 = scmp.ne.s32.totalorder %s97, %s100
    %p109 = scmp.eq.s32.totalorder %s14, 1
    %p110 = por %p108, %p109
    %p111 = scmp.ne.s32.totalorder %s100, %s101
    %p112 = scmp.eq.s32.totalorder %s14, 0
    %p113 = por %p111, %p112
    %p114 = scmp.ne.s32.totalorder %s100, %s101
    %p115 = scmp.eq.s32.totalorder %s15, 1
    %p116 = por %p114, %p115
    %p118 = scmp.ne.s32.totalorder %s101, %s117
    %p119 = scmp.eq.s32.totalorder %s15, 0
    %p120 = por %p118, %p119
    %p121 = scmp.le.s32.totalorder 1, %s9
    %p122 = scmp.lt.s32.totalorder %s9, 3
    %p123 = pnand %p121, %p122
    %p124 = pneg %p123
    // Predicated region
    $region9: #{encoder_forward.4} parent=5 // pred_check
      _
    $region10: #{encoder_forward.4} parent=5 // pred_check_branch
      %126 = sbr.rel (%p123) target = $region12
    $region11: #{encoder_forward.4} parent=5 // pred_region
      %s127 = ssub.s32 %s9, 1
    $region12: #{encoder_forward.4} parent=5 // pred_fallthru
      _
    %p128 = scmp.lt.s32.totalorder %s9, 2
    // Predicated region
    $region13: #{encoder_forward.4} parent=5 // pred_check
      %p129 = pneg %p128
    $region14: #{encoder_forward.4} parent=5 // pred_check_branch
      %131 = sbr.rel (%p129) target = $region16
    $region15: #{encoder_forward.4} parent=5 // pred_region
      // Predicated region
      $region17: #{encoder_forward.4} parent=15 // pred_check
        %p132 = pneg %p29
      $region18: #{encoder_forward.4} parent=15 // pred_check_branch
        %134 = sbr.rel (%p132) target = $region20
      $region19: #{encoder_forward.4} parent=15 // pred_region
        %s135 = smul.u32 4, %s9
        %p136 = scmp.lt.s32.totalorder %s135, 7
        %s137 = scalar_select %p136, %s135, 7
        %s138 = smul.addr %s137, 4
        %s139 = scalar_lea.vmem %s0, %s138
        %s140 = smul.u32 4, %s9
      $region20: #{encoder_forward.4} parent=15 // pred_fallthru
        _
      // Predicated region
      $region21: #{encoder_forward.4} parent=15 // pred_check
        %p141 = pneg %p55
      $region22: #{encoder_forward.4} parent=15 // pred_check_branch
        %143 = sbr.rel (%p141) target = $region24
      $region23: #{encoder_forward.4} parent=15 // pred_region
        %s144 = smul.u32 4, %s9
        %p145 = scmp.lt.s32.totalorder %s144, 7
        %s146 = scalar_select %p145, %s144, 7
        %s147 = smul.addr %s146, 4
        %s148 = scalar_lea.vmem %s1, %s147
        %s149 = smul.u32 4, %s9
      $region24: #{encoder_forward.4} parent=15 // pred_fallthru
        _
      // Predicated region
      $region25: #{encoder_forward.4} parent=15 // pred_check
        %p150 = pneg %p81
      $region26: #{encoder_forward.4} parent=15 // pred_check_branch
        %152 = sbr.rel (%p150) target = $region28
      $region27: #{encoder_forward.4} parent=15 // pred_region
        %s153 = smul.u32 4, %s9
        %p154 = scmp.lt.s32.totalorder %s153, 7
        %s155 = scalar_select %p154, %s153, 7
        %s156 = smul.addr %s155, 4
        %s157 = scalar_lea.vmem %s2, %s156
        %s158 = smul.u32 4, %s9
      $region28: #{encoder_forward.4} parent=15 // pred_fallthru
        _
    $region16: #{encoder_forward.4} parent=5 // pred_fallthru
      _
    %p159 = scmp.le.s32.totalorder 1, %s9
    %p160 = scmp.lt.s32.totalorder %s9, 3
    %p161 = pnand %p159, %p160
    %p162 = pneg %p161
    // Predicated region
    $region29: #{encoder_forward.4} parent=5 // pred_check
      _
    $region30: #{encoder_forward.4} parent=5 // pred_check_branch
      %164 = sbr.rel (%p161) target = $region32
    $region31: #{encoder_forward.4} parent=5 // pred_region
      %s165 = ssub.s32 %s9, 1
      %s166 = smul.u32 4, %s14
      %p167 = scmp.lt.s32.totalorder %s166, 7
      %s168 = scalar_select %p167, %s166, 7
      %s169 = smul.addr %s168, 4
      %s170 = scalar_lea.vmem %s0, %s169
      %p171 = pneg %p35
      %p172 = pneg %p32
      %s173 = smul.u32 4, %s14
      %p174 = scmp.lt.s32.totalorder %s173, 7
      %s175 = scalar_select %p174, %s173, 7
      %s176 = smul.addr %s175, 4
      %s177 = scalar_lea.vmem %s1, %s176
      %p178 = pneg %p61
      %p179 = pneg %p58
      %s180 = smul.u32 4, %s14
      %p181 = scmp.lt.s32.totalorder %s180, 7
      %s182 = scalar_select %p181, %s180, 7
      %s183 = smul.addr %s182, 4
      %s184 = scalar_lea.vmem %s2, %s183
      %p185 = pneg %p87
      %p186 = pneg %p84
      %p187 = pneg %p113
      %p188 = pneg %p110
      %s189 = smul.u32 4, %s14
      %p190 = scmp.lt.s32.totalorder %s189, 7
      %s191 = scalar_select %p190, %s189, 7
      %s192 = smul.addr %s191, 4
      %s193 = scalar_lea.vmem %s3, %s192
      %s194 = smul.u32 4, %s14
      %p195 = scmp.lt.s32.totalorder %s194, 7
      %s196 = scalar_select %p195, %s194, 7
      %s197 = smul.addr %s196, 4
      %s198 = scalar_lea.vmem %s0, %s197
      %s199 = smul.u32 4, %s14
      %s200 = smul.u32 4, %s14
      %p201 = scmp.lt.s32.totalorder %s200, 7
      %s202 = scalar_select %p201, %s200, 7
      %s203 = smul.addr %s202, 4
      %s204 = scalar_lea.vmem %s1, %s203
      %s205 = smul.u32 4, %s14
      %s206 = smul.u32 4, %s14
      %p207 = scmp.lt.s32.totalorder %s206, 7
      %s208 = scalar_select %p207, %s206, 7
      %s209 = smul.addr %s208, 4
      %s210 = scalar_lea.vmem %s2, %s209
      %s211 = smul.u32 4, %s14
      %s212 = smul.u32 4, %s14
      %p213 = scmp.lt.s32.totalorder %s212, 7
      %s214 = scalar_select %p213, %s212, 7
      %s215 = smul.addr %s214, 4
      %s216 = scalar_lea.vmem %s3, %s215
      %s217 = smul.u32 4, %s14
      %v220 = vld [vmem:[%s198] sm:$0xf]
      %v221 = vld [vmem:[%s198 + $0x4] sm:$0xf]
      %v222 = vld [vmem:[%s198 + $0x8] sm:$0xf]
      %v223 = vld [vmem:[%s198 + $0xc] sm:$0xf]
      %v224 = vmul.bf16 %v220, 1043676725
      %v225 = vmul.bf16 %v221, 1043676725
      %v226 = vmul.bf16 %v222, 1043676725
      %v227 = vmul.bf16 %v223, 1043676725
      %v228 = vld [vmem:[%s204] sm:$0xf]
      %v229 = vld [vmem:[%s204 + $0x4] sm:$0xf]
      %v230 = vld [vmem:[%s204 + $0x8] sm:$0xf]
      %v231 = vld [vmem:[%s204 + $0xc] sm:$0xf]
      %v232 = vld [vmem:[%s210] sm:$0xf]
      %v233 = vld [vmem:[%s210 + $0x4] sm:$0xf]
      %v234 = vld [vmem:[%s210 + $0x8] sm:$0xf]
      %v235 = vld [vmem:[%s210 + $0xc] sm:$0xf]
      %vm236 = vcmask 261120
      %v238 = vsel %vm236, %v224, 0
      %v241 = vsel %vm236, %v228, 0
      %243 = vmatprep.subr.bf16.mxu0 0
      %244 = vmatpush1.bf16.xpose.msra.mxu0 %v241
      %245 = vmatprep.subr.bf16.mxu0 0
      %246 = vmatpush1.bf16.xpose.msra.mxu0 0
      %247 = vmatprep.subr.bf16.mxu0 0
      %248 = vmatpush1.bf16.xpose.msra.mxu0 0
      %249 = vmatprep.subr.bf16.mxu0 0
      %250 = vmatpush1.bf16.xpose.msra.mxu0 0
      %251 = vmatprep.subr.bf16.mxu0 0
      %252 = vmatpush1.bf16.xpose.msra.mxu0 0
      %253 = vmatprep.subr.bf16.mxu0 0
      %254 = vmatpush1.bf16.xpose.msra.mxu0 0
      %255 = vmatprep.subr.bf16.mxu0 0
      %256 = vmatpush1.bf16.xpose.msra.mxu0 0
      %257 = vmatprep.subr.bf16.mxu0 0
      %258 = vmatpush1.bf16.xpose.msra.mxu0 0
      %259 = vmatprep.subr.bf16.mxu0 0
      %260 = vmatpush1.bf16.xpose.msra.mxu0 0
      %261 = vmatprep.subr.bf16.mxu0 0
      %262 = vmatpush1.bf16.xpose.msra.mxu0 0
      %263 = vmatprep.subr.bf16.mxu0 0
      %264 = vmatpush1.bf16.xpose.msra.mxu0 0
      %265 = vmatprep.subr.bf16.mxu0 0
      %266 = vmatpush1.bf16.xpose.msra.mxu0 0
      %267 = vmatprep.subr.bf16.mxu0 0
      %268 = vmatpush1.bf16.xpose.msra.mxu0 0
      %269 = vmatprep.subr.bf16.mxu0 0
      %270 = vmatpush1.bf16.xpose.msra.mxu0 0
      %271 = vmatprep.subr.bf16.mxu0 0
      %272 = vmatpush1.bf16.xpose.msra.mxu0 0
      %273 = vmatprep.subr.bf16.mxu0 0
      %274 = vmatpush1.bf16.xpose.msra.mxu0 0
      %275 = vmatprep.mubr.bf16.mxu0 0
      %276 = vmatmul.mubr.bf16.gmra.mrb[0].mxu0 %v238
      %v277 = vpop.f32.mrb[0].mxu0
      %v278 = vadd.f32 0.0, %v277
      %v279 = vpop.f32.mrb[0].mxu0
      %v280 = vpop.f32.mrb[0].mxu0
      %v281 = vpop.f32.mrb[0].mxu0
      %282 = vdwg.mxu0
      %v284 = vsel %vm236, %v225, 0
      %v287 = vsel %vm236, %v229, 0
      %289 = vmatprep.subr.bf16.mxu0 0
      %290 = vmatpush1.bf16.xpose.msra.mxu0 %v287
      %291 = vmatprep.subr.bf16.mxu0 0
      %292 = vmatpush1.bf16.xpose.msra.mxu0 0
      %293 = vmatprep.subr.bf16.mxu0 0
      %294 = vmatpush1.bf16.xpose.msra.mxu0 0
      %295 = vmatprep.subr.bf16.mxu0 0
      %296 = vmatpush1.bf16.xpose.msra.mxu0 0
      %297 = vmatprep.subr.bf16.mxu0 0
      %298 = vmatpush1.bf16.xpose.msra.mxu0 0
      %299 = vmatprep.subr.bf16.mxu0 0
      %300 = vmatpush1.bf16.xpose.msra.mxu0 0
      %301 = vmatprep.subr.bf16.mxu0 0
      %302 = vmatpush1.bf16.xpose.msra.mxu0 0
      %303 = vmatprep.subr.bf16.mxu0 0
      %304 = vmatpush1.bf16.xpose.msra.mxu0 0
      %305 = vmatprep.subr.bf16.mxu0 0
      %306 = vmatpush1.bf16.xpose.msra.mxu0 0
      %307 = vmatprep.subr.bf16.mxu0 0
      %308 = vmatpush1.bf16.xpose.msra.mxu0 0
      %309 = vmatprep.subr.bf16.mxu0 0
      %310 = vmatpush1.bf16.xpose.msra.mxu0 0
      %311 = vmatprep.subr.bf16.mxu0 0
      %312 = vmatpush1.bf16.xpose.msra.mxu0 0
      %313 = vmatprep.subr.bf16.mxu0 0
      %314 = vmatpush1.bf16.xpose.msra.mxu0 0
      %315 = vmatprep.subr.bf16.mxu0 0
      %316 = vmatpush1.bf16.xpose.msra.mxu0 0
      %317 = vmatprep.subr.bf16.mxu0 0
      %318 = vmatpush1.bf16.xpose.msra.mxu0 0
      %319 = vmatprep.subr.bf16.mxu0 0
      %320 = vmatpush1.bf16.xpose.msra.mxu0 0
      %321 = vmatprep.mubr.bf16.mxu0 0
      %322 = vmatmul.mubr.bf16.gmra.mrb[0].mxu0 %v284
      %v323 = vpop.f32.mrb[0].mxu0
      %v324 = vadd.f32 0.0, %v323
      %v325 = vpop.f32.mrb[0].mxu0
      %v326 = vpop.f32.mrb[0].mxu0
      %v327 = vpop.f32.mrb[0].mxu0
      %328 = vdwg.mxu0
      %v330 = vsel %vm236, %v226, 0
      %v333 = vsel %vm236, %v230, 0
      %335 = vmatprep.subr.bf16.mxu0 0
      %336 = vmatpush1.bf16.xpose.msra.mxu0 %v333
      %337 = vmatprep.subr.bf16.mxu0 0
      %338 = vmatpush1.bf16.xpose.msra.mxu0 0
      %339 = vmatprep.subr.bf16.mxu0 0
      %340 = vmatpush1.bf16.xpose.msra.mxu0 0
      %341 = vmatprep.subr.bf16.mxu0 0
      %342 = vmatpush1.bf16.xpose.msra.mxu0 0
      %343 = vmatprep.subr.bf16.mxu0 0
      %344 = vmatpush1.bf16.xpose.msra.mxu0 0
      %345 = vmatprep.subr.bf16.mxu0 0
      %346 = vmatpush1.bf16.xpose.msra.mxu0 0
      %347 = vmatprep.subr.bf16.mxu0 0
      %348 = vmatpush1.bf16.xpose.msra.mxu0 0
      %349 = vmatprep.subr.bf16.mxu0 0
      %350 = vmatpush1.bf16.xpose.msra.mxu0 0
      %351 = vmatprep.subr.bf16.mxu0 0
      %352 = vmatpush1.bf16.xpose.msra.mxu0 0
      %353 = vmatprep.subr.bf16.mxu0 0
      %354 = vmatpush1.bf16.xpose.msra.mxu0 0
      %355 = vmatprep.subr.bf16.mxu0 0
      %356 = vmatpush1.bf16.xpose.msra.mxu0 0
      %357 = vmatprep.subr.bf16.mxu0 0
      %358 = vmatpush1.bf16.xpose.msra.mxu0 0
      %359 = vmatprep.subr.bf16.mxu0 0
      %360 = vmatpush1.bf16.xpose.msra.mxu0 0
      %361 = vmatprep.subr.bf16.mxu0 0
      %362 = vmatpush1.bf16.xpose.msra.mxu0 0
      %363 = vmatprep.subr.bf16.mxu0 0
      %364 = vmatpush1.bf16.xpose.msra.mxu0 0
      %365 = vmatprep.subr.bf16.mxu0 0
      %366 = vmatpush1.bf16.xpose.msra.mxu0 0
      %367 = vmatprep.mubr.bf16.mxu0 0
      %368 = vmatmul.mubr.bf16.gmra.mrb[0].mxu0 %v330
      %v369 = vpop.f32.mrb[0].mxu0
      %v370 = vadd.f32 0.0, %v369
      %v371 = vpop.f32.mrb[0].mxu0
      %v372 = vpop.f32.mrb[0].mxu0
      %v373 = vpop.f32.mrb[0].mxu0
      %374 = vdwg.mxu0
      %v376 = vsel %vm236, %v227, 0
      %v379 = vsel %vm236, %v231, 0
      %381 = vmatprep.subr.bf16.mxu0 0
      %382 = vmatpush1.bf16.xpose.msra.mxu0 %v379
      %383 = vmatprep.subr.bf16.mxu0 0
      %384 = vmatpush1.bf16.xpose.msra.mxu0 0
      %385 = vmatprep.subr.bf16.mxu0 0
      %386 = vmatpush1.bf16.xpose.msra.mxu0 0
      %387 = vmatprep.subr.bf16.mxu0 0
      %388 = vmatpush1.bf16.xpose.msra.mxu0 0
      %389 = vmatprep.subr.bf16.mxu0 0
      %390 = vmatpush1.bf16.xpose.msra.mxu0 0
      %391 = vmatprep.subr.bf16.mxu0 0
      %392 = vmatpush1.bf16.xpose.msra.mxu0 0
      %393 = vmatprep.subr.bf16.mxu0 0
      %394 = vmatpush1.bf16.xpose.msra.mxu0 0
      %395 = vmatprep.subr.bf16.mxu0 0
      %396 = vmatpush1.bf16.xpose.msra.mxu0 0
      %397 = vmatprep.subr.bf16.mxu0 0
      %398 = vmatpush1.bf16.xpose.msra.mxu0 0
      %399 = vmatprep.subr.bf16.mxu0 0
      %400 = vmatpush1.bf16.xpose.msra.mxu0 0
      %401 = vmatprep.subr.bf16.mxu0 0
      %402 = vmatpush1.bf16.xpose.msra.mxu0 0
      %403 = vmatprep.subr.bf16.mxu0 0
      %404 = vmatpush1.bf16.xpose.msra.mxu0 0
      %405 = vmatprep.subr.bf16.mxu0 0
      %406 = vmatpush1.bf16.xpose.msra.mxu0 0
      %407 = vmatprep.subr.bf16.mxu0 0
      %408 = vmatpush1.bf16.xpose.msra.mxu0 0
      %409 = vmatprep.subr.bf16.mxu0 0
      %410 = vmatpush1.bf16.xpose.msra.mxu0 0
      %411 = vmatprep.subr.bf16.mxu0 0
      %412 = vmatpush1.bf16.xpose.msra.mxu0 0
      %413 = vmatprep.mubr.bf16.mxu0 0
      %414 = vmatmul.mubr.bf16.gmra.mrb[0].mxu0 %v376
      %v415 = vpop.f32.mrb[0].mxu0
      %v416 = vadd.f32 0.0, %v415
      %v417 = vpop.f32.mrb[0].mxu0
      %v418 = vpop.f32.mrb[0].mxu0
      %v419 = vpop.f32.mrb[0].mxu0
      %420 = vdwg.mxu0
      %vm421 = vcmask 64512
      %v422 = vsel %vm421, %v278, -inf
      %423 = vmax.xlane.f32.xlu0 %v422
      %v424 = vpop.xlane.xlu0 %423
      %v425 = vsel %vm421, %v324, -inf
      %426 = vmax.xlane.f32.xlu0 %v425
      %v427 = vpop.xlane.xlu0 %426
      %v428 = vsel %vm421, %v370, -inf
      %429 = vmax.xlane.f32.xlu0 %v428
      %v430 = vpop.xlane.xlu0 %429
      %v431 = vsel %vm421, %v416, -inf
      %432 = vmax.xlane.f32.xlu0 %v431
      %v433 = vpop.xlane.xlu0 %432
      %v434 = vsub.f32 %v278, %v424
      %v435 = vsub.f32 %v324, %v427
      %v436 = vsub.f32 %v370, %v430
      %v437 = vsub.f32 %v416, %v433
      %v438 = vmul.f32 %v434, 1.442695
      %v439 = vpow.pop %v438
      %v440 = vmul.f32 %v435, 1.442695
      %v441 = vpow.pop %v440
      %v442 = vmul.f32 %v436, 1.442695
      %v443 = vpow.pop %v442
      %v444 = vmul.f32 %v437, 1.442695
      %v445 = vpow.pop %v444
      %v446 = vsel %vm421, %v439, 0.0
      %447 = vadd.xlane.f32.xlu0 %v446
      %v448 = vpop.xlane.xlu0 %447
      %v449 = vsel %vm421, %v441, 0.0
      %450 = vadd.xlane.f32.xlu0 %v449
      %v451 = vpop.xlane.xlu0 %450
      %v452 = vsel %vm421, %v443, 0.0
      %453 = vadd.xlane.f32.xlu0 %v452
      %v454 = vpop.xlane.xlu0 %453
      %v455 = vsel %vm421, %v445, 0.0
      %456 = vadd.xlane.f32.xlu0 %v455
      %v457 = vpop.xlane.xlu0 %456
      %v458 = vrcp.pop %v448
      %v459 = vrcp.pop %v451
      %v460 = vrcp.pop %v454
      %v461 = vrcp.pop %v457
      %v462 = vmul.f32 %v439, %v458
      %v463 = vmul.f32 %v441, %v459
      %v464 = vmul.f32 %v443, %v460
      %v465 = vmul.f32 %v445, %v461
      %v466 = vpack.c.bf16 %v462, %v462
      %v467 = vpack.c.bf16 %v463, %v463
      %v468 = vpack.c.bf16 %v464, %v464
      %v469 = vpack.c.bf16 %v465, %v465
      %v471 = vsel %vm421, %v466, 0
      %vm473 = vcmask 1043456
      %v475 = vsel %vm473, %v232, 0
      %477 = vmatprep.subr.bf16.mxu0 0
      %478 = vmatpush1.bf16.msra.mxu0 %v475
      %479 = vmatprep.subr.bf16.mxu0 0
      %480 = vmatpush1.bf16.msra.mxu0 0
      %481 = vmatprep.subr.bf16.mxu0 0
      %482 = vmatpush1.bf16.msra.mxu0 0
      %483 = vmatprep.subr.bf16.mxu0 0
      %484 = vmatpush1.bf16.msra.mxu0 0
      %485 = vmatprep.subr.bf16.mxu0 0
      %486 = vmatpush1.bf16.msra.mxu0 0
      %487 = vmatprep.subr.bf16.mxu0 0
      %488 = vmatpush1.bf16.msra.mxu0 0
      %489 = vmatprep.subr.bf16.mxu0 0
      %490 = vmatpush1.bf16.msra.mxu0 0
      %491 = vmatprep.subr.bf16.mxu0 0
      %492 = vmatpush1.bf16.msra.mxu0 0
      %493 = vmatprep.subr.bf16.mxu0 0
      %494 = vmatpush1.bf16.msra.mxu0 0
      %495 = vmatprep.subr.bf16.mxu0 0
      %496 = vmatpush1.bf16.msra.mxu0 0
      %497 = vmatprep.subr.bf16.mxu0 0
      %498 = vmatpush1.bf16.msra.mxu0 0
      %499 = vmatprep.subr.bf16.mxu0 0
      %500 = vmatpush1.bf16.msra.mxu0 0
      %501 = vmatprep.subr.bf16.mxu0 0
      %502 = vmatpush1.bf16.msra.mxu0 0
      %503 = vmatprep.subr.bf16.mxu0 0
      %504 = vmatpush1.bf16.msra.mxu0 0
      %505 = vmatprep.subr.bf16.mxu0 0
      %506 = vmatpush1.bf16.msra.mxu0 0
      %507 = vmatprep.subr.bf16.mxu0 0
      %508 = vmatpush1.bf16.msra.mxu0 0
      %509 = vmatprep.mubr.bf16.mxu0 0
      %510 = vmatmul.mubr.bf16.gmra.mrb[0].mxu0 %v471
      %v511 = vpop.f32.mrb[0].mxu0
      %v512 = vadd.f32 0.0, %v511
      %v513 = vpop.f32.mrb[0].mxu0
      %v514 = vpop.f32.mrb[0].mxu0
      %v515 = vpop.f32.mrb[0].mxu0
      %516 = vdwg.mxu0
      %v518 = vsel %vm421, %v467, 0
      %v521 = vsel %vm473, %v233, 0
      %523 = vmatprep.subr.bf16.mxu0 0
      %524 = vmatpush1.bf16.msra.mxu0 %v521
      %525 = vmatprep.subr.bf16.mxu0 0
      %526 = vmatpush1.bf16.msra.mxu0 0
      %527 = vmatprep.subr.bf16.mxu0 0
      %528 = vmatpush1.bf16.msra.mxu0 0
      %529 = vmatprep.subr.bf16.mxu0 0
      %530 = vmatpush1.bf16.msra.mxu0 0
      %531 = vmatprep.subr.bf16.mxu0 0
      %532 = vmatpush1.bf16.msra.mxu0 0
      %533 = vmatprep.subr.bf16.mxu0 0
      %534 = vmatpush1.bf16.msra.mxu0 0
      %535 = vmatprep.subr.bf16.mxu0 0
      %536 = vmatpush1.bf16.msra.mxu0 0
      %537 = vmatprep.subr.bf16.mxu0 0
      %538 = vmatpush1.bf16.msra.mxu0 0
      %539 = vmatprep.subr.bf16.mxu0 0
      %540 = vmatpush1.bf16.msra.mxu0 0
      %541 = vmatprep.subr.bf16.mxu0 0
      %542 = vmatpush1.bf16.msra.mxu0 0
      %543 = vmatprep.subr.bf16.mxu0 0
      %544 = vmatpush1.bf16.msra.mxu0 0
      %545 = vmatprep.subr.bf16.mxu0 0
      %546 = vmatpush1.bf16.msra.mxu0 0
      %547 = vmatprep.subr.bf16.mxu0 0
      %548 = vmatpush1.bf16.msra.mxu0 0
      %549 = vmatprep.subr.bf16.mxu0 0
      %550 = vmatpush1.bf16.msra.mxu0 0
      %551 = vmatprep.subr.bf16.mxu0 0
      %552 = vmatpush1.bf16.msra.mxu0 0
      %553 = vmatprep.subr.bf16.mxu0 0
      %554 = vmatpush1.bf16.msra.mxu0 0
      %555 = vmatprep.mubr.bf16.mxu0 0
      %556 = vmatmul.mubr.bf16.gmra.mrb[0].mxu0 %v518
      %v557 = vpop.f32.mrb[0].mxu0
      %v558 = vadd.f32 0.0, %v557
      %v559 = vpop.f32.mrb[0].mxu0
      %v560 = vpop.f32.mrb[0].mxu0
      %v561 = vpop.f32.mrb[0].mxu0
      %562 = vdwg.mxu0
      %v564 = vsel %vm421, %v468, 0
      %v567 = vsel %vm473, %v234, 0
      %569 = vmatprep.subr.bf16.mxu0 0
      %570 = vmatpush1.bf16.msra.mxu0 %v567
      %571 = vmatprep.subr.bf16.mxu0 0
      %572 = vmatpush1.bf16.msra.mxu0 0
      %573 = vmatprep.subr.bf16.mxu0 0
      %574 = vmatpush1.bf16.msra.mxu0 0
      %575 = vmatprep.subr.bf16.mxu0 0
      %576 = vmatpush1.bf16.msra.mxu0 0
      %577 = vmatprep.subr.bf16.mxu0 0
      %578 = vmatpush1.bf16.msra.mxu0 0
      %579 = vmatprep.subr.bf16.mxu0 0
      %580 = vmatpush1.bf16.msra.mxu0 0
      %581 = vmatprep.subr.bf16.mxu0 0
      %582 = vmatpush1.bf16.msra.mxu0 0
      %583 = vmatprep.subr.bf16.mxu0 0
      %584 = vmatpush1.bf16.msra.mxu0 0
      %585 = vmatprep.subr.bf16.mxu0 0
      %586 = vmatpush1.bf16.msra.mxu0 0
      %587 = vmatprep.subr.bf16.mxu0 0
      %588 = vmatpush1.bf16.msra.mxu0 0
      %589 = vmatprep.subr.bf16.mxu0 0
      %590 = vmatpush1.bf16.msra.mxu0 0
      %591 = vmatprep.subr.bf16.mxu0 0
      %592 = vmatpush1.bf16.msra.mxu0 0
      %593 = vmatprep.subr.bf16.mxu0 0
      %594 = vmatpush1.bf16.msra.mxu0 0
      %595 = vmatprep.subr.bf16.mxu0 0
      %596 = vmatpush1.bf16.msra.mxu0 0
      %597 = vmatprep.subr.bf16.mxu0 0
      %598 = vmatpush1.bf16.msra.mxu0 0
      %599 = vmatprep.subr.bf16.mxu0 0
      %600 = vmatpush1.bf16.msra.mxu0 0
      %601 = vmatprep.mubr.bf16.mxu0 0
      %602 = vmatmul.mubr.bf16.gmra.mrb[0].mxu0 %v564
      %v603 = vpop.f32.mrb[0].mxu0
      %v604 = vadd.f32 0.0, %v603
      %v605 = vpop.f32.mrb[0].mxu0
      %v606 = vpop.f32.mrb[0].mxu0
      %v607 = vpop.f32.mrb[0].mxu0
      %608 = vdwg.mxu0
      %v610 = vsel %vm421, %v469, 0
      %v613 = vsel %vm473, %v235, 0
      %615 = vmatprep.subr.bf16.mxu0 0
      %616 = vmatpush1.bf16.msra.mxu0 %v613
      %617 = vmatprep.subr.bf16.mxu0 0
      %618 = vmatpush1.bf16.msra.mxu0 0
      %619 = vmatprep.subr.bf16.mxu0 0
      %620 = vmatpush1.bf16.msra.mxu0 0
      %621 = vmatprep.subr.bf16.mxu0 0
      %622 = vmatpush1.bf16.msra.mxu0 0
      %623 = vmatprep.subr.bf16.mxu0 0
      %624 = vmatpush1.bf16.msra.mxu0 0
      %625 = vmatprep.subr.bf16.mxu0 0
      %626 = vmatpush1.bf16.msra.mxu0 0
      %627 = vmatprep.subr.bf16.mxu0 0
      %628 = vmatpush1.bf16.msra.mxu0 0
      %629 = vmatprep.subr.bf16.mxu0 0
      %630 = vmatpush1.bf16.msra.mxu0 0
      %631 = vmatprep.subr.bf16.mxu0 0
      %632 = vmatpush1.bf16.msra.mxu0 0
      %633 = vmatprep.subr.bf16.mxu0 0
      %634 = vmatpush1.bf16.msra.mxu0 0
      %635 = vmatprep.subr.bf16.mxu0 0
      %636 = vmatpush1.bf16.msra.mxu0 0
      %637 = vmatprep.subr.bf16.mxu0 0
      %638 = vmatpush1.bf16.msra.mxu0 0
      %639 = vmatprep.subr.bf16.mxu0 0
      %640 = vmatpush1.bf16.msra.mxu0 0
      %641 = vmatprep.subr.bf16.mxu0 0
      %642 = vmatpush1.bf16.msra.mxu0 0
      %643 = vmatprep.subr.bf16.mxu0 0
      %644 = vmatpush1.bf16.msra.mxu0 0
      %645 = vmatprep.subr.bf16.mxu0 0
      %646 = vmatpush1.bf16.msra.mxu0 0
      %647 = vmatprep.mubr.bf16.mxu0 0
      %648 = vmatmul.mubr.bf16.gmra.mrb[0].mxu0 %v610
      %v649 = vpop.f32.mrb[0].mxu0
      %v650 = vadd.f32 0.0, %v649
      %v651 = vpop.f32.mrb[0].mxu0
      %v652 = vpop.f32.mrb[0].mxu0
      %v653 = vpop.f32.mrb[0].mxu0
      %654 = vdwg.mxu0
      %v655 = vpack.c.bf16 %v512, %v512
      %v656 = vpack.c.bf16 %v558, %v558
      %v657 = vpack.c.bf16 %v604, %v604
      %v658 = vpack.c.bf16 %v650, %v650
      %vm659 = vcmask 257024
      %660 = vst.msk [vmem:[%s216] sm:$0xf] %vm659, %v655
      %661 = vst.msk [vmem:[%s216 + $0x4] sm:$0xf] %vm659, %v656
      %662 = vst.msk [vmem:[%s216 + $0x8] sm:$0xf] %vm659, %v657
      %663 = vst.msk [vmem:[%s216 + $0xc] sm:$0xf] %vm659, %v658
      %s664 = smul.u32 4, %s14
      %p665 = scmp.lt.s32.totalorder %s664, 7
      %s666 = scalar_select %p665, %s664, 7
      %s667 = smul.addr %s666, 4
      %s668 = scalar_lea.vmem %s3, %s667
      // Predicated region
      $region33: #{encoder_forward.4} parent=31 // pred_check
        %p669 = pneg %p110
      $region34: #{encoder_forward.4} parent=31 // pred_check_branch
        %671 = sbr.rel (%p669) target = $region36
      $region35: #{encoder_forward.4} parent=31 // pred_region
        %s672 = smul.u32 4, %s14
      $region36: #{encoder_forward.4} parent=31 // pred_fallthru
        _
    $region32: #{encoder_forward.4} parent=5 // pred_fallthru
      _
    %p673 = scmp.le.s32.totalorder 2, %s9
    // Predicated region
    $region37: #{encoder_forward.4} parent=5 // pred_check
      %p674 = pneg %p673
    $region38: #{encoder_forward.4} parent=5 // pred_check_branch
      %676 = sbr.rel (%p674) target = $region40
    $region39: #{encoder_forward.4} parent=5 // pred_region
      %s677 = ssub.s32 %s9, 2
      // Predicated region
      $region41: #{encoder_forward.4} parent=39 // pred_check
        %p678 = pneg %p116
      $region42: #{encoder_forward.4} parent=39 // pred_check_branch
        %680 = sbr.rel (%p678) target = $region44
      $region43: #{encoder_forward.4} parent=39 // pred_region
        %s681 = smul.u32 4, %s15
        %p682 = scmp.lt.s32.totalorder %s681, 7
        %s683 = scalar_select %p682, %s681, 7
        %s684 = smul.addr %s683, 4
        %s685 = scalar_lea.vmem %s3, %s684
      $region44: #{encoder_forward.4} parent=39 // pred_fallthru
        _
    $region40: #{encoder_forward.4} parent=5 // pred_fallthru
      _
  $region6: #{encoder_forward.4} parent=0 // loop_footer
    %s13 = sadd.s32 1, %s9
  $region7: #{encoder_forward.4} parent=0 // loop_footer_branch
    %8 = sbr.rel target = $region3
  $region8: #{encoder_forward.4} parent=0 // loop_exit
    _

// kernel: encoder_forward.5
$region0: #{encoder_forward.5}
  #allocation0 [shape = 'u32[]', space=smem, size = 0x4, offset = 0x4, fixed_abs, tag = 'smem constant byte address 0x4 - core index']
  #allocation1 [shape = 'u32[144,128]{1,0:T(1,128)}', space=vmem, size = 0x12000, scoped, tag = 'internal scratch']
  %s0 = inlined_call_operand.vmem [shape: bf16[16,128], index: 0, kind: input, shape index: {}]
  %s1 = inlined_call_operand.vmem [shape: f32[16,128], index: 1, kind: input, shape index: {}]
  %s2 = inlined_call_operand.vmem [shape: bf16[128,128], index: 2, kind: input, shape index: {}]
  %s3 = inlined_call_operand.vmem [shape: f32[1,128], index: 3, kind: input, shape index: {}]
  %s4 = inlined_call_operand.vmem [shape: f32[1,128], index: 4, kind: input, shape index: {}]
  %s5 = inlined_call_operand.vmem [shape: f32[1,128], index: 5, kind: input, shape index: {}]
  %s6 = inlined_call_operand.vmem [shape: bf16[128,256], index: 6, kind: input, shape index: {}]
  %s7 = inlined_call_operand.vmem [shape: f32[1,256], index: 7, kind: input, shape index: {}]
  %s8 = inlined_call_operand.vmem [shape: bf16[256,128], index: 8, kind: input, shape index: {}]
  %s9 = inlined_call_operand.vmem [shape: f32[1,128], index: 9, kind: input, shape index: {}]
  %s10 = inlined_call_operand.vmem [shape: f32[1,128], index: 10, kind: input, shape index: {}]
  %s11 = inlined_call_operand.vmem [shape: f32[1,128], index: 11, kind: input, shape index: {}]
  %s12 = inlined_call_operand.hbm [shape: f32[16,128], index: 12, kind: output, shape index: {}]
  %s13 = sld [smem:[#allocation0]]
  $region58: #{encoder_forward.5} parent=0
    _
  %s15 = ssub.s32 1, %s13
  %s16 = scalar_select 0, %s15, %s13
  $region1: #{encoder_forward.5} parent=0
    #allocation2 [shape = 'u8[8192]{0}', space=vmem, size = 0x2000, scoped, tag = 'output window, operand 0, single buffered']
    #allocation3 [shape = 's32[1]{0}', space=sflag, size = 0x4, scoped, tag = 'scoped memory for encoder_forward.5']
    %17 = vsyncpa [#allocation3], 0
    // Predicated region
    $region2: #{encoder_forward.5} parent=1 // pred_check
      _
    $region3: #{encoder_forward.5} parent=1 // pred_check_branch
      %19 = sbr.rel (0) target = $region5
    $region4: #{encoder_forward.5} parent=1 // pred_region
      _
    $region5: #{encoder_forward.5} parent=1 // pred_fallthru
      _
    // Predicated region
    $region6: #{encoder_forward.5} parent=1 // pred_check
      _
    $region7: #{encoder_forward.5} parent=1 // pred_check_branch
      %21 = sbr.rel (0) target = $region9
    $region8: #{encoder_forward.5} parent=1 // pred_region
      _
    $region9: #{encoder_forward.5} parent=1 // pred_fallthru
      _
    // Predicated region
    $region10: #{encoder_forward.5} parent=1 // pred_check
      _
    $region11: #{encoder_forward.5} parent=1 // pred_check_branch
      %23 = sbr.rel (0) target = $region13
    $region12: #{encoder_forward.5} parent=1 // pred_region
      _
    $region13: #{encoder_forward.5} parent=1 // pred_fallthru
      _
    // Predicated region
    $region14: #{encoder_forward.5} parent=1 // pred_check
      _
    $region15: #{encoder_forward.5} parent=1 // pred_check_branch
      %25 = sbr.rel (0) target = $region17
    $region16: #{encoder_forward.5} parent=1 // pred_region
      _
    $region17: #{encoder_forward.5} parent=1 // pred_fallthru
      _
    // Predicated region
    $region18: #{encoder_forward.5} parent=1 // pred_check
      _
    $region19: #{encoder_forward.5} parent=1 // pred_check_branch
      %27 = sbr.rel (0) target = $region21
    $region20: #{encoder_forward.5} parent=1 // pred_region
      _
    $region21: #{encoder_forward.5} parent=1 // pred_fallthru
      _
    // Predicated region
    $region22: #{encoder_forward.5} parent=1 // pred_check
      _
    $region23: #{encoder_forward.5} parent=1 // pred_check_branch
      %29 = sbr.rel (0) target = $region25
    $region24: #{encoder_forward.5} parent=1 // pred_region
      _
    $region25: #{encoder_forward.5} parent=1 // pred_fallthru
      _
    // Predicated region
    $region26: #{encoder_forward.5} parent=1 // pred_check
      _
    $region27: #{encoder_forward.5} parent=1 // pred_check_branch
      %31 = sbr.rel (0) target = $region29
    $region28: #{encoder_forward.5} parent=1 // pred_region
      _
    $region29: #{encoder_forward.5} parent=1 // pred_fallthru
      _
    // Predicated region
    $region30: #{encoder_forward.5} parent=1 // pred_check
      _
    $region31: #{encoder_forward.5} parent=1 // pred_check_branch
      %33 = sbr.rel (0) target = $region33
    $region32: #{encoder_forward.5} parent=1 // pred_region
      _
    $region33: #{encoder_forward.5} parent=1 // pred_fallthru
      _
    // Predicated region
    $region34: #{encoder_forward.5} parent=1 // pred_check
      _
    $region35: #{encoder_forward.5} parent=1 // pred_check_branch
      %35 = sbr.rel (0) target = $region37
    $region36: #{encoder_forward.5} parent=1 // pred_region
      _
    $region37: #{encoder_forward.5} parent=1 // pred_fallthru
      _
    // Predicated region
    $region38: #{encoder_forward.5} parent=1 // pred_check
      _
    $region39: #{encoder_forward.5} parent=1 // pred_check_branch
      %37 = sbr.rel (0) target = $region41
    $region40: #{encoder_forward.5} parent=1 // pred_region
      _
    $region41: #{encoder_forward.5} parent=1 // pred_fallthru
      _
    // Predicated region
    $region42: #{encoder_forward.5} parent=1 // pred_check
      _
    $region43: #{encoder_forward.5} parent=1 // pred_check_branch
      %39 = sbr.rel (0) target = $region45
    $region44: #{encoder_forward.5} parent=1 // pred_region
      _
    $region45: #{encoder_forward.5} parent=1 // pred_fallthru
      _
    // Predicated region
    $region46: #{encoder_forward.5} parent=1 // pred_check
      _
    $region47: #{encoder_forward.5} parent=1 // pred_check_branch
      %41 = sbr.rel (0) target = $region49
    $region48: #{encoder_forward.5} parent=1 // pred_region
      _
    $region49: #{encoder_forward.5} parent=1 // pred_fallthru
      _
    %v43 = vld [vmem:[%s1] sm:$0xff]
    %v44 = vld [vmem:[%s1 + $0x8] sm:$0xff]
    %v45 = vld [vmem:[%s0] sm:$0xf]
    %v46 = vld [vmem:[%s0 + $0x4] sm:$0xf]
    %v47 = vld [vmem:[%s2] sm:$0xf]
    %v48 = vld [vmem:[%s2 + $0x4] sm:$0xf]
    %v49 = vld [vmem:[%s2 + $0x8] sm:$0xf]
    %v50 = vld [vmem:[%s2 + $0xc] sm:$0xf]
    %v51 = vld [vmem:[%s2 + $0x10] sm:$0xf]
    %v52 = vld [vmem:[%s2 + $0x14] sm:$0xf]
    %v53 = vld [vmem:[%s2 + $0x18] sm:$0xf]
    %v54 = vld [vmem:[%s2 + $0x1c] sm:$0xf]
    %v55 = vld [vmem:[%s2 + $0x20] sm:$0xf]
    %v56 = vld [vmem:[%s2 + $0x24] sm:$0xf]
    %v57 = vld [vmem:[%s2 + $0x28] sm:$0xf]
    %v58 = vld [vmem:[%s2 + $0x2c] sm:$0xf]
    %v59 = vld [vmem:[%s2 + $0x30] sm:$0xf]
    %v60 = vld [vmem:[%s2 + $0x34] sm:$0xf]
    %v61 = vld [vmem:[%s2 + $0x38] sm:$0xf]
    %v62 = vld [vmem:[%s2 + $0x3c] sm:$0xf]
    %v63 = vld [vmem:[%s3] sm:$0x1]
    %v65 = vlaneseq
    %v66 = vshrl.u32 %v65, 7
    %v67 = vsub.s32 0, %v66
    %v68 = vrot.slane %v63, %v67
    %v72 = vunpack.c.l.b16 %v45
    %v73 = vunpack.c.l.b16 %v46
    %v74 = vpack.c.b16 %v73, %v72
    %v92 = vunpack.c.l.b16 %v47
    %v93 = vunpack.c.l.b16 %v48
    %v94 = vunpack.c.l.b16 %v49
    %v95 = vunpack.c.l.b16 %v50
    %v96 = vunpack.c.l.b16 %v51
    %v97 = vunpack.c.l.b16 %v52
    %v98 = vunpack.c.l.b16 %v53
    %v99 = vunpack.c.l.b16 %v54
    %v100 = vunpack.c.l.b16 %v55
    %v101 = vunpack.c.l.b16 %v56
    %v102 = vunpack.c.l.b16 %v57
    %v103 = vunpack.c.l.b16 %v58
    %v104 = vunpack.c.l.b16 %v59
    %v105 = vunpack.c.l.b16 %v60
    %v106 = vunpack.c.l.b16 %v61
    %v107 = vunpack.c.l.b16 %v62
    %v108 = vpack.c.b16 %v93, %v92
    %v109 = vpack.c.b16 %v95, %v94
    %v110 = vpack.c.b16 %v97, %v96
    %v111 = vpack.c.b16 %v99, %v98
    %v112 = vpack.c.b16 %v101, %v100
    %v113 = vpack.c.b16 %v103, %v102
    %v114 = vpack.c.b16 %v105, %v104
    %v115 = vpack.c.b16 %v107, %v106
    %124 = vmatprep.subr.bf16.mxu0 0
    %125 = vmatpush1.bf16.msra.mxu0 %v108
    %126 = vmatprep.subr.bf16.mxu0 0
    %127 = vmatpush1.bf16.msra.mxu0 %v109
    %128 = vmatprep.subr.bf16.mxu0 0
    %129 = vmatpush1.bf16.msra.mxu0 %v110
    %130 = vmatprep.subr.bf16.mxu0 0
    %131 = vmatpush1.bf16.msra.mxu0 %v111
    %132 = vmatprep.subr.bf16.mxu0 0
    %133 = vmatpush1.bf16.msra.mxu0 %v112
    %134 = vmatprep.subr.bf16.mxu0 0
    %135 = vmatpush1.bf16.msra.mxu0 %v113
    %136 = vmatprep.subr.bf16.mxu0 0
    %137 = vmatpush1.bf16.msra.mxu0 %v114
    %138 = vmatprep.subr.bf16.mxu0 0
    %139 = vmatpush1.bf16.msra.mxu0 %v115
    %140 = vmatprep.subr.bf16.mxu0 0
    %141 = vmatpush1.bf16.msra.mxu0 0
    %142 = vmatprep.subr.bf16.mxu0 0
    %143 = vmatpush1.bf16.msra.mxu0 0
    %144 = vmatprep.subr.bf16.mxu0 0
    %145 = vmatpush1.bf16.msra.mxu0 0
    %146 = vmatprep.subr.bf16.mxu0 0
    %147 = vmatpush1.bf16.msra.mxu0 0
    %148 = vmatprep.subr.bf16.mxu0 0
    %149 = vmatpush1.bf16.msra.mxu0 0
    %150 = vmatprep.subr.bf16.mxu0 0
    %151 = vmatpush1.bf16.msra.mxu0 0
    %152 = vmatprep.subr.bf16.mxu0 0
    %153 = vmatpush1.bf16.msra.mxu0 0
    %154 = vmatprep.subr.bf16.mxu0 0
    %155 = vmatpush1.bf16.msra.mxu0 0
    %156 = vmatprep.mubr.bf16.mxu0 0
    %157 = vmatmul.mubr.bf16.gmra.mrb[0].mxu0 %v74
    %v158 = vpop.f32.mrb[0].mxu0
    %v159 = vadd.f32 %v68, %v158
    %v160 = vpop.f32.mrb[0].mxu0
    %v161 = vpop.f32.mrb[0].mxu0
    %v162 = vadd.f32 %v68, %v161
    %v163 = vpop.f32.mrb[0].mxu0
    %164 = vdwg.mxu0
    %v165 = vadd.f32 %v159, %v43
    %v166 = vadd.f32 %v162, %v44
    %167 = vadd.xlane.f32.xlu0 %v165
    %v168 = vpop.xlane.xlu0 %167
    %169 = vadd.xlane.f32.xlu0 %v166
    %v170 = vpop.xlane.xlu0 %169
    %v171 = vrcp.pop 128.0
    %v172 = vmul.f32 %v168, %v171
    %v173 = vmul.f32 %v170, %v171
    %v174 = vsub.f32 %v165, %v172
    %v175 = vsub.f32 %v166, %v173
    %v176 = vmul.f32 %v174, %v174
    %v177 = vmul.f32 %v175, %v175
    %178 = vadd.xlane.f32.xlu0 %v176
    %v179 = vpop.xlane.xlu0 %178
    %180 = vadd.xlane.f32.xlu0 %v177
    %v181 = vpop.xlane.xlu0 %180
    %v182 = vmul.f32 %v179, %v171
    %v183 = vmul.f32 %v181, %v171
    %v184 = vadd.f32 %v182, 1e-05
    %v185 = vadd.f32 %v183, 1e-05
    %v186 = vrsqrt.pop %v184
    %v187 = vrsqrt.pop %v185
    %v188 = vmul.f32 %v174, %v186
    %v189 = vmul.f32 %v175, %v187
    %v190 = vld [vmem:[%s4] sm:$0x1]
    %v192 = vlaneseq
    %v193 = vshrl.u32 %v192, 7
    %v194 = vsub.s32 0, %v193
    %v195 = vrot.slane %v190, %v194
    %v197 = vmul.f32 %v188, %v195
    %v198 = vmul.f32 %v189, %v195
    %v199 = vld [vmem:[%s5] sm:$0x1]
    %v201 = vlaneseq
    %v202 = vshrl.u32 %v201, 7
    %v203 = vsub.s32 0, %v202
    %v204 = vrot.slane %v199, %v203
    %v206 = vadd.f32 %v197, %v204
    %v207 = vadd.f32 %v198, %v204
    %v208 = vpack.c.bf16 %v207, %v206
    %v209 = vld [vmem:[%s6] sm:$0xff]
    %v210 = vld [vmem:[%s6 + $0x8] sm:$0xff]
    %v211 = vld [vmem:[%s6 + $0x10] sm:$0xff]
    %v212 = vld [vmem:[%s6 + $0x18] sm:$0xff]
    %v213 = vld [vmem:[%s6 + $0x20] sm:$0xff]
    %v214 = vld [vmem:[%s6 + $0x28] sm:$0xff]
    %v215 = vld [vmem:[%s6 + $0x30] sm:$0xff]
    %v216 = vld [vmem:[%s6 + $0x38] sm:$0xff]
    %v217 = vld [vmem:[%s6 + $0x40] sm:$0xff]
    %v218 = vld [vmem:[%s6 + $0x48] sm:$0xff]
    %v219 = vld [vmem:[%s6 + $0x50] sm:$0xff]
    %v220 = vld [vmem:[%s6 + $0x58] sm:$0xff]
    %v221 = vld [vmem:[%s6 + $0x60] sm:$0xff]
    %v222 = vld [vmem:[%s6 + $0x68] sm:$0xff]
    %v223 = vld [vmem:[%s6 + $0x70] sm:$0xff]
    %v224 = vld [vmem:[%s6 + $0x78] sm:$0xff]
    %v225 = vld [vmem:[%s7] sm:$0x3]
    %v227 = vlaneseq
    %v228 = vshrl.u32 %v227, 7
    %v229 = vsub.s32 0, %v228
    %v230 = vrot.slane %v225, %v229
    %v231 = vlaneseq
    %v232 = vshrl.u32 %v231, 7
    %v233 = vsub.s32 1, %v232
    %v234 = vrot.slane %v225, %v233
    %v253 = vunpack.c.l.b16 %v209
    %v254 = vunpack.c.h.b16 %v209
    %v255 = vunpack.c.l.b16 %v210
    %v256 = vunpack.c.h.b16 %v210
    %v257 = vunpack.c.l.b16 %v211
    %v258 = vunpack.c.h.b16 %v211
    %v259 = vunpack.c.l.b16 %v212
    %v260 = vunpack.c.h.b16 %v212
    %v261 = vunpack.c.l.b16 %v213
    %v262 = vunpack.c.h.b16 %v213
    %v263 = vunpack.c.l.b16 %v214
    %v264 = vunpack.c.h.b16 %v214
    %v265 = vunpack.c.l.b16 %v215
    %v266 = vunpack.c.h.b16 %v215
    %v267 = vunpack.c.l.b16 %v216
    %v268 = vunpack.c.h.b16 %v216
    %v269 = vunpack.c.l.b16 %v217
    %v270 = vunpack.c.h.b16 %v217
    %v271 = vunpack.c.l.b16 %v218
    %v272 = vunpack.c.h.b16 %v218
    %v273 = vunpack.c.l.b16 %v219
    %v274 = vunpack.c.h.b16 %v219
    %v275 = vunpack.c.l.b16 %v220
    %v276 = vunpack.c.h.b16 %v220
    %v277 = vunpack.c.l.b16 %v221
    %v278 = vunpack.c.h.b16 %v221
    %v279 = vunpack.c.l.b16 %v222
    %v280 = vunpack.c.h.b16 %v222
    %v281 = vunpack.c.l.b16 %v223
    %v282 = vunpack.c.h.b16 %v223
    %v283 = vunpack.c.l.b16 %v224
    %v284 = vunpack.c.h.b16 %v224
    %v285 = vpack.c.b16 %v255, %v253
    %v286 = vpack.c.b16 %v256, %v254
    %v287 = vpack.c.b16 %v259, %v257
    %v288 = vpack.c.b16 %v260, %v258
    %v289 = vpack.c.b16 %v263, %v261
    %v290 = vpack.c.b16 %v264, %v262
    %v291 = vpack.c.b16 %v267, %v265
    %v292 = vpack.c.b16 %v268, %v266
    %v293 = vpack.c.b16 %v271, %v269
    %v294 = vpack.c.b16 %v272, %v270
    %v295 = vpack.c.b16 %v275, %v273
    %v296 = vpack.c.b16 %v276, %v274
    %v297 = vpack.c.b16 %v279, %v277
    %v298 = vpack.c.b16 %v280, %v278
    %v299 = vpack.c.b16 %v283, %v281
    %v300 = vpack.c.b16 %v284, %v282
    %317 = vmatprep.subr.bf16.mxu0 %v286
    %318 = vmatpush1.bf16.msra.mxu0 %v285
    %319 = vmatprep.subr.bf16.mxu0 %v288
    %320 = vmatpush1.bf16.msra.mxu0 %v287
    %321 = vmatprep.subr.bf16.mxu0 %v290
    %322 = vmatpush1.bf16.msra.mxu0 %v289
    %323 = vmatprep.subr.bf16.mxu0 %v292
    %324 = vmatpush1.bf16.msra.mxu0 %v291
    %325 = vmatprep.subr.bf16.mxu0 %v294
    %326 = vmatpush1.bf16.msra.mxu0 %v293
    %327 = vmatprep.subr.bf16.mxu0 %v296
    %328 = vmatpush1.bf16.msra.mxu0 %v295
    %329 = vmatprep.subr.bf16.mxu0 %v298
    %330 = vmatpush1.bf16.msra.mxu0 %v297
    %331 = vmatprep.subr.bf16.mxu0 %v300
    %332 = vmatpush1.bf16.msra.mxu0 %v299
    %333 = vmatprep.subr.bf16.mxu0 0
    %334 = vmatpush1.bf16.msra.mxu0 0
    %335 = vmatprep.subr.bf16.mxu0 0
    %336 = vmatpush1.bf16.msra.mxu0 0
    %337 = vmatprep.subr.bf16.mxu0 0
    %338 = vmatpush1.bf16.msra.mxu0 0
    %339 = vmatprep.subr.bf16.mxu0 0
    %340 = vmatpush1.bf16.msra.mxu0 0
    %341 = vmatprep.subr.bf16.mxu0 0
    %342 = vmatpush1.bf16.msra.mxu0 0
    %343 = vmatprep.subr.bf16.mxu0 0
    %344 = vmatpush1.bf16.msra.mxu0 0
    %345 = vmatprep.subr.bf16.mxu0 0
    %346 = vmatpush1.bf16.msra.mxu0 0
    %347 = vmatprep.subr.bf16.mxu0 0
    %348 = vmatpush1.bf16.msra.mxu0 0
    %349 = vmatprep.mubr.bf16.mxu0 0
    %350 = vmatmul.mubr.bf16.gmra.mrb[0].mxu0 %v208
    %v351 = vpop.f32.mrb[0].mxu0
    %v352 = vadd.f32 %v230, %v351
    %v353 = vpop.f32.mrb[0].mxu0
    %v354 = vadd.f32 %v234, %v353
    %v355 = vpop.f32.mrb[0].mxu0
    %v356 = vadd.f32 %v230, %v355
    %v357 = vpop.f32.mrb[0].mxu0
    %v358 = vadd.f32 %v234, %v357
    %359 = vdwg.mxu0
    %v360 = vmax.f32 %v352, 0.0
    %v361 = vmax.f32 %v354, 0.0
    %v362 = vmax.f32 %v356, 0.0
    %v363 = vmax.f32 %v358, 0.0
    %v364 = vpack.c.bf16 %v362, %v360
    %v365 = vpack.c.bf16 %v363, %v361
    %v366 = vld [vmem:[%s8] sm:$0xf]
    %v367 = vld [vmem:[%s8 + $0x4] sm:$0xf]
    %v368 = vld [vmem:[%s8 + $0x8] sm:$0xf]
    %v369 = vld [vmem:[%s8 + $0xc] sm:$0xf]
    %v370 = vld [vmem:[%s8 + $0x10] sm:$0xf]
    %v371 = vld [vmem:[%s8 + $0x14] sm:$0xf]
    %v372 = vld [vmem:[%s8 + $0x18] sm:$0xf]
    %v373 = vld [vmem:[%s8 + $0x1c] sm:$0xf]
    %v374 = vld [vmem:[%s8 + $0x20] sm:$0xf]
    %v375 = vld [vmem:[%s8 + $0x24] sm:$0xf]
    %v376 = vld [vmem:[%s8 + $0x28] sm:$0xf]
    %v377 = vld [vmem:[%s8 + $0x2c] sm:$0xf]
    %v378 = vld [vmem:[%s8 + $0x30] sm:$0xf]
    %v379 = vld [vmem:[%s8 + $0x34] sm:$0xf]
    %v380 = vld [vmem:[%s8 + $0x38] sm:$0xf]
    %v381 = vld [vmem:[%s8 + $0x3c] sm:$0xf]
    %v382 = vld [vmem:[%s8 + $0x40] sm:$0xf]
    %v383 = vld [vmem:[%s8 + $0x44] sm:$0xf]
    %v384 = vld [vmem:[%s8 + $0x48] sm:$0xf]
    %v385 = vld [vmem:[%s8 + $0x4c] sm:$0xf]
    %v386 = vld [vmem:[%s8 + $0x50] sm:$0xf]
    %v387 = vld [vmem:[%s8 + $0x54] sm:$0xf]
    %v388 = vld [vmem:[%s8 + $0x58] sm:$0xf]
    %v389 = vld [vmem:[%s8 + $0x5c] sm:$0xf]
    %v390 = vld [vmem:[%s8 + $0x60] sm:$0xf]
    %v391 = vld [vmem:[%s8 + $0x64] sm:$0xf]
    %v392 = vld [vmem:[%s8 + $0x68] sm:$0xf]
    %v393 = vld [vmem:[%s8 + $0x6c] sm:$0xf]
    %v394 = vld [vmem:[%s8 + $0x70] sm:$0xf]
    %v395 = vld [vmem:[%s8 + $0x74] sm:$0xf]
    %v396 = vld [vmem:[%s8 + $0x78] sm:$0xf]
    %v397 = vld [vmem:[%s8 + $0x7c] sm:$0xf]
    %v398 = vld [vmem:[%s9] sm:$0x1]
    %v400 = vlaneseq
    %v401 = vshrl.u32 %v400, 7
    %v402 = vsub.s32 0, %v401
    %v403 = vrot.slane %v398, %v402
    %v437 = vunpack.c.l.b16 %v366
    %v438 = vunpack.c.l.b16 %v367
    %v439 = vunpack.c.l.b16 %v368
    %v440 = vunpack.c.l.b16 %v369
    %v441 = vunpack.c.l.b16 %v370
    %v442 = vunpack.c.l.b16 %v371
    %v443 = vunpack.c.l.b16 %v372
    %v444 = vunpack.c.l.b16 %v373
    %v445 = vunpack.c.l.b16 %v374
    %v446 = vunpack.c.l.b16 %v375
    %v447 = vunpack.c.l.b16 %v376
    %v448 = vunpack.c.l.b16 %v377
    %v449 = vunpack.c.l.b16 %v378
    %v450 = vunpack.c.l.b16 %v379
    %v451 = vunpack.c.l.b16 %v380
    %v452 = vunpack.c.l.b16 %v381
    %v453 = vunpack.c.l.b16 %v382
    %v454 = vunpack.c.l.b16 %v383
    %v455 = vunpack.c.l.b16 %v384
    %v456 = vunpack.c.l.b16 %v385
    %v457 = vunpack.c.l.b16 %v386
    %v458 = vunpack.c.l.b16 %v387
    %v459 = vunpack.c.l.b16 %v388
    %v460 = vunpack.c.l.b16 %v389
    %v461 = vunpack.c.l.b16 %v390
    %v462 = vunpack.c.l.b16 %v391
    %v463 = vunpack.c.l.b16 %v392
    %v464 = vunpack.c.l.b16 %v393
    %v465 = vunpack.c.l.b16 %v394
    %v466 = vunpack.c.l.b16 %v395
    %v467 = vunpack.c.l.b16 %v396
    %v468 = vunpack.c.l.b16 %v397
    %v469 = vpack.c.b16 %v438, %v437
    %v470 = vpack.c.b16 %v440, %v439
    %v471 = vpack.c.b16 %v442, %v441
    %v472 = vpack.c.b16 %v444, %v443
    %v473 = vpack.c.b16 %v446, %v445
    %v474 = vpack.c.b16 %v448, %v447
    %v475 = vpack.c.b16 %v450, %v449
    %v476 = vpack.c.b16 %v452, %v451
    %v477 = vpack.c.b16 %v454, %v453
    %v478 = vpack.c.b16 %v456, %v455
    %v479 = vpack.c.b16 %v458, %v457
    %v480 = vpack.c.b16 %v460, %v459
    %v481 = vpack.c.b16 %v462, %v461
    %v482 = vpack.c.b16 %v464, %v463
    %v483 = vpack.c.b16 %v466, %v465
    %v484 = vpack.c.b16 %v468, %v467
    %501 = vmatprep.subr.bf16.mxu0 0
    %502 = vmatpush1.bf16.msra.mxu0 %v469
    %503 = vmatprep.subr.bf16.mxu0 0
    %504 = vmatpush1.bf16.msra.mxu0 %v470
    %505 = vmatprep.subr.bf16.mxu0 0
    %506 = vmatpush1.bf16.msra.mxu0 %v471
    %507 = vmatprep.subr.bf16.mxu0 0
    %508 = vmatpush1.bf16.msra.mxu0 %v472
    %509 = vmatprep.subr.bf16.mxu0 0
    %510 = vmatpush1.bf16.msra.mxu0 %v473
    %511 = vmatprep.subr.bf16.mxu0 0
    %512 = vmatpush1.bf16.msra.mxu0 %v474
    %513 = vmatprep.subr.bf16.mxu0 0
    %514 = vmatpush1.bf16.msra.mxu0 %v475
    %515 = vmatprep.subr.bf16.mxu0 0
    %516 = vmatpush1.bf16.msra.mxu0 %v476
    %517 = vmatprep.subr.bf16.mxu0 0
    %518 = vmatpush1.bf16.msra.mxu0 %v477
    %519 = vmatprep.subr.bf16.mxu0 0
    %520 = vmatpush1.bf16.msra.mxu0 %v478
    %521 = vmatprep.subr.bf16.mxu0 0
    %522 = vmatpush1.bf16.msra.mxu0 %v479
    %523 = vmatprep.subr.bf16.mxu0 0
    %524 = vmatpush1.bf16.msra.mxu0 %v480
    %525 = vmatprep.subr.bf16.mxu0 0
    %526 = vmatpush1.bf16.msra.mxu0 %v481
    %527 = vmatprep.subr.bf16.mxu0 0
    %528 = vmatpush1.bf16.msra.mxu0 %v482
    %529 = vmatprep.subr.bf16.mxu0 0
    %530 = vmatpush1.bf16.msra.mxu0 %v483
    %531 = vmatprep.subr.bf16.mxu0 0
    %532 = vmatpush1.bf16.msra.mxu0 %v484
    %533 = vmatprep.mubr.bf16.mxu0 %v365
    %534 = vmatmul.mubr.bf16.gmra.mrb[0].mxu0 %v364
    %v535 = vpop.f32.mrb[0].mxu0
    %v536 = vadd.f32 %v403, %v535
    %v537 = vpop.f32.mrb[0].mxu0
    %v538 = vpop.f32.mrb[0].mxu0
    %v539 = vadd.f32 %v403, %v538
    %v540 = vpop.f32.mrb[0].mxu0
    %541 = vdwg.mxu0
    %v542 = vadd.f32 %v536, %v206
    %v543 = vadd.f32 %v539, %v207
    %544 = vadd.xlane.f32.xlu0 %v542
    %v545 = vpop.xlane.xlu0 %544
    %546 = vadd.xlane.f32.xlu0 %v543
    %v547 = vpop.xlane.xlu0 %546
    %v548 = vmul.f32 %v545, %v171
    %v549 = vmul.f32 %v547, %v171
    %v550 = vsub.f32 %v542, %v548
    %v551 = vsub.f32 %v543, %v549
    %v552 = vmul.f32 %v550, %v550
    %v553 = vmul.f32 %v551, %v551
    %554 = vadd.xlane.f32.xlu0 %v552
    %v555 = vpop.xlane.xlu0 %554
    %556 = vadd.xlane.f32.xlu0 %v553
    %v557 = vpop.xlane.xlu0 %556
    %v558 = vmul.f32 %v555, %v171
    %v559 = vmul.f32 %v557, %v171
    %v560 = vadd.f32 %v558, 1e-05
    %v561 = vadd.f32 %v559, 1e-05
    %v562 = vrsqrt.pop %v560
    %v563 = vrsqrt.pop %v561
    %v564 = vmul.f32 %v550, %v562
    %v565 = vmul.f32 %v551, %v563
    %v566 = vld [vmem:[%s10] sm:$0x1]
    %v568 = vlaneseq
    %v569 = vshrl.u32 %v568, 7
    %v570 = vsub.s32 0, %v569
    %v571 = vrot.slane %v566, %v570
    %v573 = vmul.f32 %v564, %v571
    %v574 = vmul.f32 %v565, %v571
    %v575 = vld [vmem:[%s11] sm:$0x1]
    %v577 = vlaneseq
    %v578 = vshrl.u32 %v577, 7
    %v579 = vsub.s32 0, %v578
    %v580 = vrot.slane %v575, %v579
    %v582 = vadd.f32 %v573, %v580
    %v583 = vadd.f32 %v574, %v580
    %584 = vst [vmem:[#allocation2] sm:$0xff] %v582
    %585 = vst [vmem:[#allocation2 + $0x8] sm:$0xff] %v583
    // Predicated region
    $region50: #{encoder_forward.5} parent=1 // pred_check
      _
    $region51: #{encoder_forward.5} parent=1 // pred_check_branch
      %587 = sbr.rel (0) target = $region53
    $region52: #{encoder_forward.5} parent=1 // pred_region
      %s589 = ssub.s32 256, 256
      %590 = vsyncadd [#allocation3], %s589
      %s591 = sshll.u32 [#allocation2], 4
      %s592 = int_to_ptr.vmem [resolvable:$true] %s591
      %597 = dma.vmem_to_hbm [thread:$0]  %s592, 256, %s12, [#allocation3], 128, 128, 8
    $region53: #{encoder_forward.5} parent=1 // pred_fallthru
      _
    // Predicated region
    $region54: #{encoder_forward.5} parent=1 // pred_check
      _
    $region55: #{encoder_forward.5} parent=1 // pred_check_branch
      %599 = sbr.rel (0) target = $region57
    $region56: #{encoder_forward.5} parent=1 // pred_region
      %600 = dma.done [#allocation3], 256
    $region57: #{encoder_forward.5} parent=1 // pred_fallthru
      _
    %601 = vsyncpa [#allocation3], 1

</llo_original>
